<compile_context>
chip_gen: v6e
topology: v6e:2x2x1
jax: 0.10.0
libtpu: 0.0.40
codegen_flags: <defaults>
</compile_context>

<pallas_src>
import functools

import jax
import jax.numpy as jnp
from jax import lax
from jax.experimental import pallas as pl
from jax.experimental.pallas import tpu as pltpu

EPS = 1e-5  # PyTorch nn.LayerNorm default eps


def _layernorm(x, w, b):
    # f32 statistics (v5e has no bf16 VPU/EUP; also better accuracy)
    mu = jnp.mean(x, axis=-1, keepdims=True)
    var = jnp.mean(jnp.square(x - mu), axis=-1, keepdims=True)
    return (x - mu) * lax.rsqrt(var + EPS) * w + b


def _heads_per_group(num_heads, head_dim):
    """Largest divisor of num_heads whose combined lane width is <= 128 so the
    attention-context stores land on 128-lane-aligned (unmasked) offsets."""
    if head_dim >= 128 or 128 % head_dim != 0:
        return 1
    cap = min(128 // head_dim, num_heads)
    for g in range(cap, 0, -1):
        if num_heads % g == 0:
            return g
    return 1


# ----------------------------- kernels ------------------------------------ #

def patch_embed_kernel(p_ref, w_ref, b_ref, o_ref):
    # p_ref: (TM, D) bf16, w_ref: (D, E) bf16, b_ref: (1, E) f32, o_ref: (TM, E) bf16
    o_ref[...] = (
        jnp.dot(p_ref[...], w_ref[...], preferred_element_type=jnp.float32)
        + b_ref[...]
    ).astype(o_ref.dtype)


def transformer_stack_kernel(
    x_ref,                                   # (BT, S, E) bf16 (pos-embedded tokens)
    ln1w_ref, ln1b_ref, wqkv_ref, bqkv_ref, wo_ref, bo_ref,
    ln2w_ref, ln2b_ref, w1_ref, b1_ref, w2_ref, b2_ref,   # per-layer (1, ...) blocks
    nw_ref, nb_ref, fw_ref, fb_ref,          # fused final LayerNorm + classifier
    o_ref,                                   # (BT, 1, Cp) f32 cls logits
    x_sc,                                    # (BT, S, E)  f32  resident activations
    qkv_sc,                                  # (S, 3E)     bf16 fused QKV scratch
    ctx_sc,                                  # (S, E)      bf16 attention context
    *, num_heads,
):
    layer = pl.program_id(1)
    last_layer = pl.num_programs(1) - 1
    BT, S, E = x_sc.shape
    hd = E // num_heads
    hpg = _heads_per_group(num_heads, hd)    # heads per 128-lane store group
    n_groups = num_heads // hpg
    gw = hpg * hd

    @pl.when(layer == 0)
    def _():
        x_sc[...] = x_ref[...].astype(jnp.float32)

    ln1w, ln1b = ln1w_ref[0], ln1b_ref[0]
    wqkv, bqkv = wqkv_ref[0], bqkv_ref[0]
    wo, bo = wo_ref[0], bo_ref[0]
    ln2w, ln2b = ln2w_ref[0], ln2b_ref[0]
    w1, b1 = w1_ref[0], b1_ref[0]
    w2, b2 = w2_ref[0], b2_ref[0]

    def per_batch(b, carry):
        x = x_sc[b]                                           # (S, E) f32

        # ---- multi-head self attention (pre-norm), 1/sqrt(hd) folded into Q ----
        h = _layernorm(x, ln1w, ln1b).astype(jnp.bfloat16)
        qkv_sc[...] = (
            jnp.dot(h, wqkv, preferred_element_type=jnp.float32) + bqkv
        ).astype(jnp.bfloat16)                                # (S, 3E) bf16 scratch

        for g in range(n_groups):                             # static, small
            parts = []
            for j in range(hpg):
                c0 = (g * hpg + j) * hd
                q = qkv_sc[:, c0:c0 + hd]                     # ref slices (bf16)
                k = qkv_sc[:, E + c0:E + c0 + hd]
                v = qkv_sc[:, 2 * E + c0:2 * E + c0 + hd]
                # q @ k^T without explicit transpose: contract the last dims.
                s = lax.dot_general(q, k, (((1,), (1,)), ((), ())),
                                    preferred_element_type=jnp.float32)
                s = s - jnp.max(s, axis=-1, keepdims=True)
                p = jnp.exp(s)
                p = p * pl.reciprocal(jnp.sum(p, axis=-1, keepdims=True),
                                      approx=True)
                parts.append(jnp.dot(p.astype(jnp.bfloat16), v,
                                     preferred_element_type=jnp.float32))
            grp = parts[0] if hpg == 1 else jnp.concatenate(parts, axis=-1)
            # 128-lane-aligned, unmasked store of the head group
            ctx_sc[:, g * gw:(g + 1) * gw] = grp.astype(jnp.bfloat16)

        attn = jnp.dot(ctx_sc[...], wo, preferred_element_type=jnp.float32) + bo
        x = x + attn

        # ---- MLP (pre-norm); per batch element so the f32 intermediate is (S, mlp)
        h2 = _layernorm(x, ln2w, ln2b).astype(jnp.bfloat16)
        m = jnp.dot(h2, w1, preferred_element_type=jnp.float32) + b1
        # TODO(synk): PyTorch nn.GELU default is exact (erf); tanh approximation
        # used for robust Mosaic lowering.
        m = jax.nn.gelu(m, approximate=True).astype(jnp.bfloat16)
        m = jnp.dot(m, w2, preferred_element_type=jnp.float32) + b2
        x_sc[b] = x + m
        return carry

    lax.fori_loop(0, BT, per_batch, 0)

    # ---- fused final LayerNorm + classifier on the cls rows only ----
    @pl.when(layer == last_layer)
    def _():
        def head_body(b, carry):
            cls = x_sc[b][0:1, :]                             # (1, E) f32
            hc = _layernorm(cls, nw_ref[...], nb_ref[...]).astype(jnp.bfloat16)
            o_ref[b] = (
                jnp.dot(hc, fw_ref[...], preferred_element_type=jnp.float32)
                + fb_ref[...]
            )
            return carry

        lax.fori_loop(0, BT, head_body, 0)


# --------------------------- wrappers / glue ------------------------------- #

def patchify(x, patch_size):
    # NCHW -> (B, num_patches, C*p*p), patches in row-major (gh, gw) order,
    # matching Conv2d(stride=patch)+flatten(2)+transpose(1,2).
    B, C, H, W = x.shape
    p = patch_size
    gh, gw = H // p, W // p
    x = x.reshape(B, C, gh, p, gw, p)
    x = x.transpose(0, 2, 4, 1, 3, 5)  # (B, gh, gw, C, p, p)
    return x.reshape(B, gh * gw, C * p * p)


def run_patch_embed(patches_flat, w, b):
    rows, D = patches_flat.shape
    E = w.shape[1]
    tm = rows
    for cand in (512, 256, 128, 64, 32, 16, 8):  # row tile (multiple of 8)
        if rows % cand == 0:
            tm = cand
            break
    return pl.pallas_call(
        patch_embed_kernel,
        out_shape=jax.ShapeDtypeStruct((rows, E), jnp.bfloat16),
        grid=(rows // tm,),
        in_specs=[
            pl.BlockSpec((tm, D), lambda i: (i, 0)),
            pl.BlockSpec((D, E), lambda i: (0, 0)),
            pl.BlockSpec((1, E), lambda i: (0, 0)),
        ],
        out_specs=pl.BlockSpec((tm, E), lambda i: (i, 0)),
        compiler_params=pltpu.CompilerParams(dimension_semantics=("parallel",)),
    )(patches_flat.astype(jnp.bfloat16), w, b)


def pick_block_batch(B, max_bt=8):
    # Keep >= 2 batch blocks when B allows so the "parallel" grid axis can shard
    # across both TensorCores on v7x; BT amortizes per-layer weight streaming.
    cap = min(max_bt, B // 2) if B >= 2 else 1
    cap = max(cap, 1)
    for bt in range(cap, 0, -1):
        if B % bt == 0:
            return bt
    return 1


def _vmem_limit_bytes():
    # ~56 MB on v7x (64 MiB physical VMEM), capped at ~100 MB on v5e/v6e (128 MiB)
    default = 64 * 1024 * 1024
    try:
        cap = int(getattr(pltpu.get_tpu_info(), "vmem_capacity_bytes", default))
    except Exception:
        cap = default
    return max(32 * 1024 * 1024, min(cap - 8 * 1024 * 1024, 100 * 1024 * 1024))


def run_transformer_stack(x3, p, *, num_heads, block_batch):
    B, S, E = x3.shape
    BT = block_batch
    nb = B // BT
    L = p["wqkv"].shape[0]
    Cp = p["fc_w"].shape[1]

    layer_names = ("ln1_w", "ln1_b", "wqkv", "bqkv", "wo", "bo",
                   "ln2_w", "ln2_b", "w1", "b1", "w2", "b2")
    layer_w = [p[n] for n in layer_names]
    head_w = [p["norm_w"], p["norm_b"], p["fc_w"], p["fc_b"]]

    in_specs = [pl.BlockSpec((BT, S, E), lambda i, l: (i, 0, 0))]
    in_specs += [pl.BlockSpec((1,) + w.shape[1:], lambda i, l: (l, 0, 0))
                 for w in layer_w]
    in_specs += [pl.BlockSpec(w.shape, lambda i, l: (0, 0)) for w in head_w]

    out = pl.pallas_call(
        functools.partial(transformer_stack_kernel, num_heads=num_heads),
        out_shape=jax.ShapeDtypeStruct((B, 1, Cp), jnp.float32),
        grid=(nb, L),
        in_specs=in_specs,
        out_specs=pl.BlockSpec((BT, 1, Cp), lambda i, l: (i, 0, 0)),
        scratch_shapes=[
            pltpu.VMEM((BT, S, E), jnp.float32),    # resident activations
            pltpu.VMEM((S, 3 * E), jnp.bfloat16),   # fused QKV scratch
            pltpu.VMEM((S, E), jnp.bfloat16),       # attention context scratch
        ],
        compiler_params=pltpu.CompilerParams(
            dimension_semantics=("parallel", "arbitrary"),
            vmem_limit_bytes=_vmem_limit_bytes(),
        ),
    )(x3, *layer_w, *head_w)
    return out.reshape(B, Cp)


def vit_forward(x, params, *, patch_size, num_heads, num_classes):
    B = x.shape[0]
    E = params["patch_w"].shape[1]

    patches = patchify(x, patch_size)                     # (B, P, C*p*p)
    _, P, D = patches.shape
    emb = run_patch_embed(patches.reshape(B * P, D),
                          params["patch_w"], params["patch_b"])
    X = emb.astype(jnp.float32).reshape(B, P, E)

    # sequence = [cls, registers..., patches...]  (matches reference cat order)
    reg = jnp.broadcast_to(params["reg_tokens"],
                           (B,) + params["reg_tokens"].shape[1:])
    cls = jnp.broadcast_to(params["cls_token"], (B, 1, E))
    X = jnp.concatenate([cls, reg, X], axis=1) + params["pos_emb"]
    X = X.astype(jnp.bfloat16)                            # halve stack input DMA

    BT = pick_block_batch(B)
    logits = run_transformer_stack(X, params, num_heads=num_heads,
                                   block_batch=BT)        # (B, Cp) f32
    return logits[:, :num_classes]


# ------------------------------ params ------------------------------------- #

def init_params(key, *, img_size, patch_size, num_classes, embedding_size,
                num_heads, num_layers, mlp_ratio, in_channels, num_registers):
    E = embedding_size
    D = in_channels * patch_size * patch_size
    P = (img_size // patch_size) ** 2
    S = P + 1 + num_registers
    hidden = E * mlp_ratio

    keys = iter(jax.random.split(key, 8 + num_layers * 8))

    def nrm(shape, scale=0.02):
        return (scale * jax.random.normal(next(keys), shape)).astype(jnp.float32)

    params = dict(
        patch_w=nrm((D, E)),
        patch_b=jnp.zeros((1, E), jnp.float32),
        cls_token=nrm((1, 1, E), 1.0),
        reg_tokens=nrm((1, num_registers, E), 1.0),
        pos_emb=nrm((1, S, E), 0.02),
        norm_w=jnp.ones((1, E), jnp.float32),
        norm_b=jnp.zeros((1, E), jnp.float32),
        fc_w=nrm((E, num_classes)),
        fc_b=jnp.zeros((1, num_classes), jnp.float32),
        blocks=[],
    )
    for _ in range(num_layers):
        params["blocks"].append(dict(
            ln1_w=jnp.ones((1, E), jnp.float32), ln1_b=jnp.zeros((1, E), jnp.float32),
            wq=nrm((E, E)), bq=jnp.zeros((1, E), jnp.float32),
            wk=nrm((E, E)), bk=jnp.zeros((1, E), jnp.float32),
            wv=nrm((E, E)), bv=jnp.zeros((1, E), jnp.float32),
            wo=nrm((E, E)), bo=jnp.zeros((1, E), jnp.float32),
            ln2_w=jnp.ones((1, E), jnp.float32), ln2_b=jnp.zeros((1, E), jnp.float32),
            w1=nrm((E, hidden)), b1=jnp.zeros((1, hidden), jnp.float32),
            w2=nrm((hidden, E)), b2=jnp.zeros((1, E), jnp.float32),
        ))
    return params


def prepare_params(raw, *, num_heads):
    """Stack per-layer weights (leading L axis), fuse QKV, fold 1/sqrt(hd) into Q,
    cast matmul weights to bf16 (f32 accumulation in-kernel), pad head to 128 lanes."""
    E = raw["patch_w"].shape[1]
    hd = E // num_heads
    scale = 1.0 / (hd ** 0.5)

    def stack(name):
        return jnp.stack([blk[name] for blk in raw["blocks"]], axis=0)

    wq = stack("wq") * scale                 # fold attention scale into Q
    bq = stack("bq") * scale
    wqkv = jnp.concatenate([wq, stack("wk"), stack("wv")], axis=-1)   # (L, E, 3E)
    bqkv = jnp.concatenate([bq, stack("bk"), stack("bv")], axis=-1)   # (L, 1, 3E)

    C = raw["fc_w"].shape[1]
    Cp = ((C + 127) // 128) * 128            # lane-dense head output
    fc_w_pad = jnp.zeros((E, Cp), jnp.float32).at[:, :C].set(raw["fc_w"])
    fc_b_pad = jnp.zeros((1, Cp), jnp.float32).at[:, :C].set(raw["fc_b"])

    bf = lambda a: a.astype(jnp.bfloat16)
    return dict(
        patch_w=bf(raw["patch_w"]), patch_b=raw["patch_b"],
        cls_token=raw["cls_token"], reg_tokens=raw["reg_tokens"],
        pos_emb=raw["pos_emb"],
        norm_w=raw["norm_w"], norm_b=raw["norm_b"],
        fc_w=bf(fc_w_pad), fc_b=fc_b_pad,
        ln1_w=stack("ln1_w"), ln1_b=stack("ln1_b"),
        wqkv=bf(wqkv), bqkv=bqkv,
        wo=bf(stack("wo")), bo=stack("bo"),
        ln2_w=stack("ln2_w"), ln2_b=stack("ln2_b"),
        w1=bf(stack("w1")), b1=stack("b1"),
        w2=bf(stack("w2")), b2=stack("b2"),
    )


# ------------------------------ main --------------------------------------- #

if __name__ == "__main__":
    cfg = dict(
        img_size=16, patch_size=4, num_classes=8, embedding_size=32,
        num_heads=2, num_layers=2, mlp_ratio=2, in_channels=4,
        num_registers=1,
    )
    batch = 2

    key = jax.random.PRNGKey(0)
    pkey, xkey = jax.random.split(key)
    raw_params = init_params(pkey, **cfg)
    params = prepare_params(raw_params, num_heads=cfg["num_heads"])

    x = jax.random.normal(
        xkey, (batch, cfg["in_channels"], cfg["img_size"], cfg["img_size"]),
        dtype=jnp.float32)

    fwd = jax.jit(functools.partial(
        vit_forward,
        patch_size=cfg["patch_size"],
        num_heads=cfg["num_heads"],
        num_classes=cfg["num_classes"]))
    out = fwd(x, params)
    jax.block_until_ready(out)

    assert out.shape == (batch, cfg["num_classes"]), out.shape
    assert out.dtype == jnp.float32
    assert bool(jnp.all(jnp.isfinite(out)))
    print("KERNEL_OK")
</pallas_src>

<mosaic_0001>
module attributes {stable_mosaic.version = 11 : i64} {
  func.func @patch_embed_kernel(%arg0: i32, %arg1: memref<32x64xbf16, #tpu.memory_space<vmem>>, %arg2: memref<64x32xbf16, #tpu.memory_space<vmem>>, %arg3: memref<1x32xf32, #tpu.memory_space<vmem>>, %arg4: memref<32x32xbf16, #tpu.memory_space<vmem>>) attributes {dimension_semantics = [#tpu.dimension_semantics<parallel>], iteration_bounds = array<i64: 1>, scalar_prefetch = 0 : i64, scratch_operands = 0 : i64, tpu.core_type = #tpu.core_type<tc>, window_params = [{transform_indices = @transform_0, window_bounds = array<i64: 32, 64>}, {pipeline_mode = #tpu.pipeline_mode<synchronous>, transform_indices = @transform_1, window_bounds = array<i64: 64, 32>}, {pipeline_mode = #tpu.pipeline_mode<synchronous>, transform_indices = @transform_2, window_bounds = array<i64: 1, 32>}, {transform_indices = @transform_3, window_bounds = array<i64: 32, 32>}]} {
    %c0 = arith.constant 0 : index
    %c0_0 = arith.constant 0 : index
    %0 = vector.load %arg1[%c0, %c0_0] : memref<32x64xbf16, #tpu.memory_space<vmem>>, vector<32x64xbf16>
    %c0_1 = arith.constant 0 : index
    %c0_2 = arith.constant 0 : index
    %1 = vector.load %arg2[%c0_1, %c0_2] : memref<64x32xbf16, #tpu.memory_space<vmem>>, vector<64x32xbf16>
    %cst = arith.constant dense<0.000000e+00> : vector<32x32xf32>
    %2 = tpu.matmul %0, %1, %cst {dimension_numbers = #tpu.dot_dimension_numbers<[1], [0], [0], [1], [0, 0, 1, 1], [], []>} : vector<32x64xbf16>, vector<64x32xbf16>, vector<32x32xf32> -> vector<32x32xf32>
    %c0_3 = arith.constant 0 : index
    %c0_4 = arith.constant 0 : index
    %3 = vector.load %arg3[%c0_3, %c0_4] : memref<1x32xf32, #tpu.memory_space<vmem>>, vector<1x32xf32>
    %4 = vector.broadcast %3 : vector<1x32xf32> to vector<32x32xf32>
    %5 = arith.addf %2, %4 : vector<32x32xf32>
    %6 = arith.truncf %5 : vector<32x32xf32> to vector<32x32xbf16>
    %c0_5 = arith.constant 0 : index
    %c0_6 = arith.constant 0 : index
    %7 = vector.load %arg4[%c0_5, %c0_6] : memref<32x32xbf16, #tpu.memory_space<vmem>>, vector<32x32xbf16>
    tpu.vector_store %arg4[%c0_5, %c0_6], %6 {strides = array<i32>} : memref<32x32xbf16, #tpu.memory_space<vmem>>, vector<32x32xbf16>,
    return
  }
  func.func @transform_0(%arg0: i32) -> (i32, i32) {
    %c0_i32 = arith.constant 0 : i32
    %c0_i32_0 = arith.constant 0 : i32
    return %arg0, %c0_i32 : i32, i32
  }
  func.func @transform_1(%arg0: i32) -> (i32, i32) {
    %c0_i32 = arith.constant 0 : i32
    %c0_i32_0 = arith.constant 0 : i32
    %c0_i32_1 = arith.constant 0 : i32
    return %c0_i32, %c0_i32_0 : i32, i32
  }
  func.func @transform_2(%arg0: i32) -> (i32, i32) {
    %c0_i32 = arith.constant 0 : i32
    %c0_i32_0 = arith.constant 0 : i32
    %c0_i32_1 = arith.constant 0 : i32
    return %c0_i32, %c0_i32_0 : i32, i32
  }
  func.func @transform_3(%arg0: i32) -> (i32, i32) {
    %c0_i32 = arith.constant 0 : i32
    %c0_i32_0 = arith.constant 0 : i32
    return %arg0, %c0_i32 : i32, i32
  }
}

module attributes {stable_mosaic.version = 11 : i64} {
  func.func @transformer_stack_kernel(%arg0: i32, %arg1: i32, %arg2: memref<1x18x32xbf16, #tpu.memory_space<vmem>>, %arg3: memref<1x1x32xf32, #tpu.memory_space<vmem>>, %arg4: memref<1x1x32xf32, #tpu.memory_space<vmem>>, %arg5: memref<1x32x96xbf16, #tpu.memory_space<vmem>>, %arg6: memref<1x1x96xf32, #tpu.memory_space<vmem>>, %arg7: memref<1x32x32xbf16, #tpu.memory_space<vmem>>, %arg8: memref<1x1x32xf32, #tpu.memory_space<vmem>>, %arg9: memref<1x1x32xf32, #tpu.memory_space<vmem>>, %arg10: memref<1x1x32xf32, #tpu.memory_space<vmem>>, %arg11: memref<1x32x64xbf16, #tpu.memory_space<vmem>>, %arg12: memref<1x1x64xf32, #tpu.memory_space<vmem>>, %arg13: memref<1x64x32xbf16, #tpu.memory_space<vmem>>, %arg14: memref<1x1x32xf32, #tpu.memory_space<vmem>>, %arg15: memref<1x32xf32, #tpu.memory_space<vmem>>, %arg16: memref<1x32xf32, #tpu.memory_space<vmem>>, %arg17: memref<32x128xbf16, #tpu.memory_space<vmem>>, %arg18: memref<1x128xf32, #tpu.memory_space<vmem>>, %arg19: memref<1x1x128xf32, #tpu.memory_space<vmem>>, %arg20: memref<1x18x32xf32, #tpu.memory_space<vmem>>, %arg21: memref<18x96xbf16, #tpu.memory_space<vmem>>, %arg22: memref<18x32xbf16, #tpu.memory_space<vmem>>) attributes {dimension_semantics = [#tpu.dimension_semantics<parallel>, #tpu.dimension_semantics<arbitrary>], iteration_bounds = array<i64: 2, 2>, scalar_prefetch = 0 : i64, scratch_operands = 3 : i64, tpu.core_type = #tpu.core_type<tc>, window_params = [{transform_indices = @transform_0, window_bounds = array<i64: 1, 18, 32>}, {transform_indices = @transform_1, window_bounds = array<i64: 1, 1, 32>}, {transform_indices = @transform_2, window_bounds = array<i64: 1, 1, 32>}, {transform_indices = @transform_3, window_bounds = array<i64: 1, 32, 96>}, {transform_indices = @transform_4, window_bounds = array<i64: 1, 1, 96>}, {transform_indices = @transform_5, window_bounds = array<i64: 1, 32, 32>}, {transform_indices = @transform_6, window_bounds = array<i64: 1, 1, 32>}, {transform_indices = @transform_7, window_bounds = array<i64: 1, 1, 32>}, {transform_indices = @transform_8, window_bounds = array<i64: 1, 1, 32>}, {transform_indices = @transform_9, window_bounds = array<i64: 1, 32, 64>}, {transform_indices = @transform_10, window_bounds = array<i64: 1, 1, 64>}, {transform_indices = @transform_11, window_bounds = array<i64: 1, 64, 32>}, {transform_indices = @transform_12, window_bounds = array<i64: 1, 1, 32>}, {pipeline_mode = #tpu.pipeline_mode<synchronous>, transform_indices = @transform_13, window_bounds = array<i64: 1, 32>}, {pipeline_mode = #tpu.pipeline_mode<synchronous>, transform_indices = @transform_14, window_bounds = array<i64: 1, 32>}, {pipeline_mode = #tpu.pipeline_mode<synchronous>, transform_indices = @transform_15, window_bounds = array<i64: 32, 128>}, {pipeline_mode = #tpu.pipeline_mode<synchronous>, transform_indices = @transform_16, window_bounds = array<i64: 1, 128>}, {transform_indices = @transform_17, window_bounds = array<i64: 1, 1, 128>}]} {
    %c0_i32 = arith.constant 0 : i32
    %0 = arith.cmpi eq, %arg1, %c0_i32 : i32
    %1 = arith.extui %0 : i1 to i32
    %c0_i32_0 = arith.constant 0 : i32
    %2 = arith.cmpi ne, %1, %c0_i32_0 : i32
    scf.if %2 {
      %c0_81 = arith.constant 0 : index
      %c0_82 = arith.constant 0 : index
      %c0_83 = arith.constant 0 : index
      %149 = vector.load %arg2[%c0_81, %c0_82, %c0_83] : memref<1x18x32xbf16, #tpu.memory_space<vmem>>, vector<1x18x32xbf16>
      %150 = arith.extf %149 : vector<1x18x32xbf16> to vector<1x18x32xf32>
      %c0_84 = arith.constant 0 : index
      %c0_85 = arith.constant 0 : index
      %c0_86 = arith.constant 0 : index
      %151 = vector.load %arg20[%c0_84, %c0_85, %c0_86] : memref<1x18x32xf32, #tpu.memory_space<vmem>>, vector<1x18x32xf32>
      tpu.vector_store %arg20[%c0_84, %c0_85, %c0_86], %150 {strides = array<i32>} : memref<1x18x32xf32, #tpu.memory_space<vmem>>, vector<1x18x32xf32>,
    } else {
    }
    %c0 = arith.constant 0 : index
    %c0_1 = arith.constant 0 : index
    %c0_2 = arith.constant 0 : index
    %3 = vector.load %arg3[%c0, %c0_1, %c0_2] : memref<1x1x32xf32, #tpu.memory_space<vmem>>, vector<1x1x32xf32>
    %4 = vector.shape_cast %3 : vector<1x1x32xf32> to vector<1x32xf32>
    %c0_3 = arith.constant 0 : index
    %c0_4 = arith.constant 0 : index
    %c0_5 = arith.constant 0 : index
    %5 = vector.load %arg4[%c0_3, %c0_4, %c0_5] : memref<1x1x32xf32, #tpu.memory_space<vmem>>, vector<1x1x32xf32>
    %6 = vector.shape_cast %5 : vector<1x1x32xf32> to vector<1x32xf32>
    %c0_6 = arith.constant 0 : index
    %c0_7 = arith.constant 0 : index
    %c0_8 = arith.constant 0 : index
    %7 = vector.load %arg5[%c0_6, %c0_7, %c0_8] : memref<1x32x96xbf16, #tpu.memory_space<vmem>>, vector<1x32x96xbf16>
    %8 = vector.shape_cast %7 : vector<1x32x96xbf16> to vector<32x96xbf16>
    %c0_9 = arith.constant 0 : index
    %c0_10 = arith.constant 0 : index
    %c0_11 = arith.constant 0 : index
    %9 = vector.load %arg6[%c0_9, %c0_10, %c0_11] : memref<1x1x96xf32, #tpu.memory_space<vmem>>, vector<1x1x96xf32>
    %10 = vector.shape_cast %9 : vector<1x1x96xf32> to vector<1x96xf32>
    %c0_12 = arith.constant 0 : index
    %c0_13 = arith.constant 0 : index
    %c0_14 = arith.constant 0 : index
    %11 = vector.load %arg7[%c0_12, %c0_13, %c0_14] : memref<1x32x32xbf16, #tpu.memory_space<vmem>>, vector<1x32x32xbf16>
    %12 = vector.shape_cast %11 : vector<1x32x32xbf16> to vector<32x32xbf16>
    %c0_15 = arith.constant 0 : index
    %c0_16 = arith.constant 0 : index
    %c0_17 = arith.constant 0 : index
    %13 = vector.load %arg8[%c0_15, %c0_16, %c0_17] : memref<1x1x32xf32, #tpu.memory_space<vmem>>, vector<1x1x32xf32>
    %14 = vector.shape_cast %13 : vector<1x1x32xf32> to vector<1x32xf32>
    %c0_18 = arith.constant 0 : index
    %c0_19 = arith.constant 0 : index
    %c0_20 = arith.constant 0 : index
    %15 = vector.load %arg9[%c0_18, %c0_19, %c0_20] : memref<1x1x32xf32, #tpu.memory_space<vmem>>, vector<1x1x32xf32>
    %16 = vector.shape_cast %15 : vector<1x1x32xf32> to vector<1x32xf32>
    %c0_21 = arith.constant 0 : index
    %c0_22 = arith.constant 0 : index
    %c0_23 = arith.constant 0 : index
    %17 = vector.load %arg10[%c0_21, %c0_22, %c0_23] : memref<1x1x32xf32, #tpu.memory_space<vmem>>, vector<1x1x32xf32>
    %18 = vector.shape_cast %17 : vector<1x1x32xf32> to vector<1x32xf32>
    %c0_24 = arith.constant 0 : index
    %c0_25 = arith.constant 0 : index
    %c0_26 = arith.constant 0 : index
    %19 = vector.load %arg11[%c0_24, %c0_25, %c0_26] : memref<1x32x64xbf16, #tpu.memory_space<vmem>>, vector<1x32x64xbf16>
    %20 = vector.shape_cast %19 : vector<1x32x64xbf16> to vector<32x64xbf16>
    %c0_27 = arith.constant 0 : index
    %c0_28 = arith.constant 0 : index
    %c0_29 = arith.constant 0 : index
    %21 = vector.load %arg12[%c0_27, %c0_28, %c0_29] : memref<1x1x64xf32, #tpu.memory_space<vmem>>, vector<1x1x64xf32>
    %22 = vector.shape_cast %21 : vector<1x1x64xf32> to vector<1x64xf32>
    %c0_30 = arith.constant 0 : index
    %c0_31 = arith.constant 0 : index
    %c0_32 = arith.constant 0 : index
    %23 = vector.load %arg13[%c0_30, %c0_31, %c0_32] : memref<1x64x32xbf16, #tpu.memory_space<vmem>>, vector<1x64x32xbf16>
    %24 = vector.shape_cast %23 : vector<1x64x32xbf16> to vector<64x32xbf16>
    %c0_33 = arith.constant 0 : index
    %c0_34 = arith.constant 0 : index
    %c0_35 = arith.constant 0 : index
    %25 = vector.load %arg14[%c0_33, %c0_34, %c0_35] : memref<1x1x32xf32, #tpu.memory_space<vmem>>, vector<1x1x32xf32>
    %26 = vector.shape_cast %25 : vector<1x1x32xf32> to vector<1x32xf32>
    %c0_i32_36 = arith.constant 0 : i32
    %27 = arith.index_cast %c0_i32_36 : i32 to index
    %c0_37 = arith.constant 0 : index
    %c0_38 = arith.constant 0 : index
    %28 = vector.load %arg20[%27, %c0_37, %c0_38] : memref<1x18x32xf32, #tpu.memory_space<vmem>>, vector<1x18x32xf32>
    %29 = vector.shape_cast %28 : vector<1x18x32xf32> to vector<18x32xf32>
    %cst = arith.constant dense<0.000000e+00> : vector<18xf32>
    %30 = vector.multi_reduction <add>, %29, %cst [1] : vector<18x32xf32> to vector<18xf32>
    %31 = vector.shape_cast %30 : vector<18xf32> to vector<18x1xf32>
    %cst_39 = arith.constant 3.200000e+01 : f32
    %32 = vector.broadcast %cst_39 : f32 to vector<18x1xf32>
    %33 = arith.divf %31, %32 : vector<18x1xf32>
    %34 = vector.broadcast %33 : vector<18x1xf32> to vector<18x32xf32>
    %35 = arith.subf %29, %34 : vector<18x32xf32>
    %36 = arith.mulf %35, %35 : vector<18x32xf32>
    %cst_40 = arith.constant dense<0.000000e+00> : vector<18xf32>
    %37 = vector.multi_reduction <add>, %36, %cst_40 [1] : vector<18x32xf32> to vector<18xf32>
    %38 = vector.shape_cast %37 : vector<18xf32> to vector<18x1xf32>
    %cst_41 = arith.constant 3.200000e+01 : f32
    %39 = vector.broadcast %cst_41 : f32 to vector<18x1xf32>
    %40 = arith.divf %38, %39 : vector<18x1xf32>
    %41 = vector.broadcast %33 : vector<18x1xf32> to vector<18x32xf32>
    %42 = arith.subf %29, %41 : vector<18x32xf32>
    %cst_42 = arith.constant 9.99999974E-6 : f32
    %43 = vector.broadcast %cst_42 : f32 to vector<18x1xf32>
    %44 = arith.addf %40, %43 : vector<18x1xf32>
    %45 = math.rsqrt %44 : vector<18x1xf32>
    %46 = vector.broadcast %45 : vector<18x1xf32> to vector<18x32xf32>
    %47 = arith.mulf %42, %46 : vector<18x32xf32>
    %48 = vector.broadcast %4 : vector<1x32xf32> to vector<18x32xf32>
    %49 = arith.mulf %47, %48 : vector<18x32xf32>
    %50 = vector.broadcast %6 : vector<1x32xf32> to vector<18x32xf32>
    %51 = arith.addf %49, %50 : vector<18x32xf32>
    %52 = arith.truncf %51 : vector<18x32xf32> to vector<18x32xbf16>
    %cst_43 = arith.constant dense<0.000000e+00> : vector<18x96xf32>
    %53 = tpu.matmul %52, %8, %cst_43 {dimension_numbers = #tpu.dot_dimension_numbers<[1], [0], [0], [1], [0, 0, 1, 1], [], []>} : vector<18x32xbf16>, vector<32x96xbf16>, vector<18x96xf32> -> vector<18x96xf32>
    %54 = vector.broadcast %10 : vector<1x96xf32> to vector<18x96xf32>
    %55 = arith.addf %53, %54 : vector<18x96xf32>
    %56 = arith.truncf %55 : vector<18x96xf32> to vector<18x96xbf16>
    %c0_44 = arith.constant 0 : index
    %c0_45 = arith.constant 0 : index
    %57 = vector.load %arg21[%c0_44, %c0_45] : memref<18x96xbf16, #tpu.memory_space<vmem>>, vector<18x96xbf16>
    tpu.vector_store %arg21[%c0_44, %c0_45], %56 {strides = array<i32>} : memref<18x96xbf16, #tpu.memory_space<vmem>>, vector<18x96xbf16>,
    %c0_46 = arith.constant 0 : index
    %c0_47 = arith.constant 0 : index
    %58 = vector.load %arg21[%c0_46, %c0_47] : memref<18x96xbf16, #tpu.memory_space<vmem>>, vector<18x16xbf16>
    %c0_48 = arith.constant 0 : index
    %c32 = arith.constant 32 : index
    %59 = vector.load %arg21[%c0_48, %c32] : memref<18x96xbf16, #tpu.memory_space<vmem>>, vector<18x16xbf16>
    %c0_49 = arith.constant 0 : index
    %c64 = arith.constant 64 : index
    %60 = vector.load %arg21[%c0_49, %c64] : memref<18x96xbf16, #tpu.memory_space<vmem>>, vector<18x16xbf16>
    %cst_50 = arith.constant dense<0.000000e+00> : vector<18x18xf32>
    %61 = tpu.matmul %58, %59, %cst_50 {dimension_numbers = #tpu.dot_dimension_numbers<[1], [1], [0], [0], [0, 0, 1, 0], [], []>} : vector<18x16xbf16>, vector<18x16xbf16>, vector<18x18xf32> -> vector<18x18xf32>
    %cst_51 = arith.constant dense<0xFF800000> : vector<18xf32>
    %62 = vector.multi_reduction <maximumf>, %61, %cst_51 [1] : vector<18x18xf32> to vector<18xf32>
    %63 = vector.shape_cast %62 : vector<18xf32> to vector<18x1xf32>
    %64 = vector.broadcast %63 : vector<18x1xf32> to vector<18x18xf32>
    %65 = arith.subf %61, %64 : vector<18x18xf32>
    %66 = math.exp %65 : vector<18x18xf32>
    %cst_52 = arith.constant dense<0.000000e+00> : vector<18xf32>
    %67 = vector.multi_reduction <add>, %66, %cst_52 [1] : vector<18x18xf32> to vector<18xf32>
    %68 = vector.shape_cast %67 : vector<18xf32> to vector<18x1xf32>
    %69 = tpu.reciprocal %68 {approx = true} : vector<18x1xf32> -> vector<18x1xf32>
    %70 = vector.broadcast %69 : vector<18x1xf32> to vector<18x18xf32>
    %71 = arith.mulf %66, %70 : vector<18x18xf32>
    %72 = arith.truncf %71 : vector<18x18xf32> to vector<18x18xbf16>
    %cst_53 = arith.constant dense<0.000000e+00> : vector<18x16xf32>
    %73 = tpu.matmul %72, %60, %cst_53 {dimension_numbers = #tpu.dot_dimension_numbers<[1], [0], [0], [1], [0, 0, 1, 1], [], []>} : vector<18x18xbf16>, vector<18x16xbf16>, vector<18x16xf32> -> vector<18x16xf32>
    %c0_54 = arith.constant 0 : index
    %c16 = arith.constant 16 : index
    %74 = vector.load %arg21[%c0_54, %c16] : memref<18x96xbf16, #tpu.memory_space<vmem>>, vector<18x16xbf16>
    %c0_55 = arith.constant 0 : index
    %c48 = arith.constant 48 : index
    %75 = vector.load %arg21[%c0_55, %c48] : memref<18x96xbf16, #tpu.memory_space<vmem>>, vector<18x16xbf16>
    %c0_56 = arith.constant 0 : index
    %c80 = arith.constant 80 : index
    %76 = vector.load %arg21[%c0_56, %c80] : memref<18x96xbf16, #tpu.memory_space<vmem>>, vector<18x16xbf16>
    %cst_57 = arith.constant dense<0.000000e+00> : vector<18x18xf32>
    %77 = tpu.matmul %74, %75, %cst_57 {dimension_numbers = #tpu.dot_dimension_numbers<[1], [1], [0], [0], [0, 0, 1, 0], [], []>} : vector<18x16xbf16>, vector<18x16xbf16>, vector<18x18xf32> -> vector<18x18xf32>
    %cst_58 = arith.constant dense<0xFF800000> : vector<18xf32>
    %78 = vector.multi_reduction <maximumf>, %77, %cst_58 [1] : vector<18x18xf32> to vector<18xf32>
    %79 = vector.shape_cast %78 : vector<18xf32> to vector<18x1xf32>
    %80 = vector.broadcast %79 : vector<18x1xf32> to vector<18x18xf32>
    %81 = arith.subf %77, %80 : vector<18x18xf32>
    %82 = math.exp %81 : vector<18x18xf32>
    %cst_59 = arith.constant dense<0.000000e+00> : vector<18xf32>
    %83 = vector.multi_reduction <add>, %82, %cst_59 [1] : vector<18x18xf32> to vector<18xf32>
    %84 = vector.shape_cast %83 : vector<18xf32> to vector<18x1xf32>
    %85 = tpu.reciprocal %84 {approx = true} : vector<18x1xf32> -> vector<18x1xf32>
    %86 = vector.broadcast %85 : vector<18x1xf32> to vector<18x18xf32>
    %87 = arith.mulf %82, %86 : vector<18x18xf32>
    %88 = arith.truncf %87 : vector<18x18xf32> to vector<18x18xbf16>
    %cst_60 = arith.constant dense<0.000000e+00> : vector<18x16xf32>
    %89 = tpu.matmul %88, %76, %cst_60 {dimension_numbers = #tpu.dot_dimension_numbers<[1], [0], [0], [1], [0, 0, 1, 1], [], []>} : vector<18x18xbf16>, vector<18x16xbf16>, vector<18x16xf32> -> vector<18x16xf32>
    %90 = tpu.concatenate %73, %89 in 1 : vector<18x16xf32>, vector<18x16xf32> -> vector<18x32xf32>
    %91 = arith.truncf %90 : vector<18x32xf32> to vector<18x32xbf16>
    %c0_61 = arith.constant 0 : index
    %c0_62 = arith.constant 0 : index
    %92 = vector.load %arg22[%c0_61, %c0_62] : memref<18x32xbf16, #tpu.memory_space<vmem>>, vector<18x32xbf16>
    tpu.vector_store %arg22[%c0_61, %c0_62], %91 {strides = array<i32>} : memref<18x32xbf16, #tpu.memory_space<vmem>>, vector<18x32xbf16>,
    %c0_63 = arith.constant 0 : index
    %c0_64 = arith.constant 0 : index
    %93 = vector.load %arg22[%c0_63, %c0_64] : memref<18x32xbf16, #tpu.memory_space<vmem>>, vector<18x32xbf16>
    %cst_65 = arith.constant dense<0.000000e+00> : vector<18x32xf32>
    %94 = tpu.matmul %93, %12, %cst_65 {dimension_numbers = #tpu.dot_dimension_numbers<[1], [0], [0], [1], [0, 0, 1, 1], [], []>} : vector<18x32xbf16>, vector<32x32xbf16>, vector<18x32xf32> -> vector<18x32xf32>
    %95 = vector.broadcast %14 : vector<1x32xf32> to vector<18x32xf32>
    %96 = arith.addf %94, %95 : vector<18x32xf32>
    %97 = arith.addf %29, %96 : vector<18x32xf32>
    %cst_66 = arith.constant dense<0.000000e+00> : vector<18xf32>
    %98 = vector.multi_reduction <add>, %97, %cst_66 [1] : vector<18x32xf32> to vector<18xf32>
    %99 = vector.shape_cast %98 : vector<18xf32> to vector<18x1xf32>
    %cst_67 = arith.constant 3.200000e+01 : f32
    %100 = vector.broadcast %cst_67 : f32 to vector<18x1xf32>
    %101 = arith.divf %99, %100 : vector<18x1xf32>
    %102 = vector.broadcast %101 : vector<18x1xf32> to vector<18x32xf32>
    %103 = arith.subf %97, %102 : vector<18x32xf32>
    %104 = arith.mulf %103, %103 : vector<18x32xf32>
    %cst_68 = arith.constant dense<0.000000e+00> : vector<18xf32>
    %105 = vector.multi_reduction <add>, %104, %cst_68 [1] : vector<18x32xf32> to vector<18xf32>
    %106 = vector.shape_cast %105 : vector<18xf32> to vector<18x1xf32>
    %cst_69 = arith.constant 3.200000e+01 : f32
    %107 = vector.broadcast %cst_69 : f32 to vector<18x1xf32>
    %108 = arith.divf %106, %107 : vector<18x1xf32>
    %109 = vector.broadcast %101 : vector<18x1xf32> to vector<18x32xf32>
    %110 = arith.subf %97, %109 : vector<18x32xf32>
    %cst_70 = arith.constant 9.99999974E-6 : f32
    %111 = vector.broadcast %cst_70 : f32 to vector<18x1xf32>
    %112 = arith.addf %108, %111 : vector<18x1xf32>
    %113 = math.rsqrt %112 : vector<18x1xf32>
    %114 = vector.broadcast %113 : vector<18x1xf32> to vector<18x32xf32>
    %115 = arith.mulf %110, %114 : vector<18x32xf32>
    %116 = vector.broadcast %16 : vector<1x32xf32> to vector<18x32xf32>
    %117 = arith.mulf %115, %116 : vector<18x32xf32>
    %118 = vector.broadcast %18 : vector<1x32xf32> to vector<18x32xf32>
    %119 = arith.addf %117, %118 : vector<18x32xf32>
    %120 = arith.truncf %119 : vector<18x32xf32> to vector<18x32xbf16>
    %cst_71 = arith.constant dense<0.000000e+00> : vector<18x64xf32>
    %121 = tpu.matmul %120, %20, %cst_71 {dimension_numbers = #tpu.dot_dimension_numbers<[1], [0], [0], [1], [0, 0, 1, 1], [], []>} : vector<18x32xbf16>, vector<32x64xbf16>, vector<18x64xf32> -> vector<18x64xf32>
    %122 = vector.broadcast %22 : vector<1x64xf32> to vector<18x64xf32>
    %123 = arith.addf %121, %122 : vector<18x64xf32>
    %124 = arith.mulf %123, %123 : vector<18x64xf32>
    %125 = arith.mulf %123, %124 : vector<18x64xf32>
    %cst_72 = arith.constant 4.471500e-02 : f32
    %126 = vector.broadcast %cst_72 : f32 to vector<18x64xf32>
    %127 = arith.mulf %126, %125 : vector<18x64xf32>
    %128 = arith.addf %123, %127 : vector<18x64xf32>
    %cst_73 = arith.constant 0.797884583 : f32
    %129 = vector.broadcast %cst_73 : f32 to vector<18x64xf32>
    %130 = arith.mulf %129, %128 : vector<18x64xf32>
    %131 = math.tanh %130 : vector<18x64xf32>
    %cst_74 = arith.constant 1.000000e+00 : f32
    %132 = vector.broadcast %cst_74 : f32 to vector<18x64xf32>
    %133 = arith.addf %132, %131 : vector<18x64xf32>
    %cst_75 = arith.constant 5.000000e-01 : f32
    %134 = vector.broadcast %cst_75 : f32 to vector<18x64xf32>
    %135 = arith.mulf %134, %133 : vector<18x64xf32>
    %136 = arith.mulf %123, %135 : vector<18x64xf32>
    %137 = arith.truncf %136 : vector<18x64xf32> to vector<18x64xbf16>
    %cst_76 = arith.constant dense<0.000000e+00> : vector<18x32xf32>
    %138 = tpu.matmul %137, %24, %cst_76 {dimension_numbers = #tpu.dot_dimension_numbers<[1], [0], [0], [1], [0, 0, 1, 1], [], []>} : vector<18x64xbf16>, vector<64x32xbf16>, vector<18x32xf32> -> vector<18x32xf32>
    %139 = vector.broadcast %26 : vector<1x32xf32> to vector<18x32xf32>
    %140 = arith.addf %138, %139 : vector<18x32xf32>
    %141 = arith.addf %97, %140 : vector<18x32xf32>
    %142 = arith.index_cast %c0_i32_36 : i32 to index
    %c0_77 = arith.constant 0 : index
    %c0_78 = arith.constant 0 : index
    %143 = vector.load %arg20[%142, %c0_77, %c0_78] : memref<1x18x32xf32, #tpu.memory_space<vmem>>, vector<1x18x32xf32>
    %144 = vector.shape_cast %143 : vector<1x18x32xf32> to vector<18x32xf32>
    %145 = vector.shape_cast %141 : vector<18x32xf32> to vector<1x18x32xf32>
    tpu.vector_store %arg20[%142, %c0_77, %c0_78], %145 {strides = array<i32>} : memref<1x18x32xf32, #tpu.memory_space<vmem>>, vector<1x18x32xf32>,
    %c1_i32 = arith.constant 1 : i32
    %c1_i32_79 = arith.constant 1 : i32
    %146 = arith.cmpi eq, %arg1, %c1_i32_79 : i32
    %147 = arith.extui %146 : i1 to i32
    %c0_i32_80 = arith.constant 0 : i32
    %148 = arith.cmpi ne, %147, %c0_i32_80 : i32
    scf.if %148 {
      %c0_i32_81 = arith.constant 0 : i32
      %149 = arith.index_cast %c0_i32_81 : i32 to index
      %c0_82 = arith.constant 0 : index
      %c0_83 = arith.constant 0 : index
      %150 = vector.load %arg20[%149, %c0_82, %c0_83] : memref<1x18x32xf32, #tpu.memory_space<vmem>>, vector<1x18x32xf32>
      %151 = vector.shape_cast %150 : vector<1x18x32xf32> to vector<18x32xf32>
      %152 = vector.extract_strided_slice %151 {offsets = [0, 0], sizes = [1, 32], strides = [1, 1]} : vector<18x32xf32> to vector<1x32xf32>
      %c0_84 = arith.constant 0 : index
      %c0_85 = arith.constant 0 : index
      %153 = vector.load %arg15[%c0_84, %c0_85] : memref<1x32xf32, #tpu.memory_space<vmem>>, vector<1x32xf32>
      %c0_86 = arith.constant 0 : index
      %c0_87 = arith.constant 0 : index
      %154 = vector.load %arg16[%c0_86, %c0_87] : memref<1x32xf32, #tpu.memory_space<vmem>>, vector<1x32xf32>
      %cst_88 = arith.constant dense<0.000000e+00> : vector<1xf32>
      %155 = vector.multi_reduction <add>, %152, %cst_88 [1] : vector<1x32xf32> to vector<1xf32>
      %156 = vector.shape_cast %155 : vector<1xf32> to vector<1x1xf32>
      %cst_89 = arith.constant 3.200000e+01 : f32
      %157 = vector.broadcast %cst_89 : f32 to vector<1x1xf32>
      %158 = arith.divf %156, %157 : vector<1x1xf32>
      %159 = vector.broadcast %158 : vector<1x1xf32> to vector<1x32xf32>
      %160 = arith.subf %152, %159 : vector<1x32xf32>
      %161 = arith.mulf %160, %160 : vector<1x32xf32>
      %cst_90 = arith.constant dense<0.000000e+00> : vector<1xf32>
      %162 = vector.multi_reduction <add>, %161, %cst_90 [1] : vector<1x32xf32> to vector<1xf32>
      %163 = vector.shape_cast %162 : vector<1xf32> to vector<1x1xf32>
      %cst_91 = arith.constant 3.200000e+01 : f32
      %164 = vector.broadcast %cst_91 : f32 to vector<1x1xf32>
      %165 = arith.divf %163, %164 : vector<1x1xf32>
      %166 = vector.broadcast %158 : vector<1x1xf32> to vector<1x32xf32>
      %167 = arith.subf %152, %166 : vector<1x32xf32>
      %cst_92 = arith.constant 9.99999974E-6 : f32
      %168 = vector.broadcast %cst_92 : f32 to vector<1x1xf32>
      %169 = arith.addf %165, %168 : vector<1x1xf32>
      %170 = math.rsqrt %169 : vector<1x1xf32>
      %171 = vector.broadcast %170 : vector<1x1xf32> to vector<1x32xf32>
      %172 = arith.mulf %167, %171 : vector<1x32xf32>
      %173 = arith.mulf %172, %153 : vector<1x32xf32>
      %174 = arith.addf %173, %154 : vector<1x32xf32>
      %175 = arith.truncf %174 : vector<1x32xf32> to vector<1x32xbf16>
      %c0_93 = arith.constant 0 : index
      %c0_94 = arith.constant 0 : index
      %176 = vector.load %arg17[%c0_93, %c0_94] : memref<32x128xbf16, #tpu.memory_space<vmem>>, vector<32x128xbf16>
      %cst_95 = arith.constant dense<0.000000e+00> : vector<1x128xf32>
      %177 = tpu.matmul %175, %176, %cst_95 {dimension_numbers = #tpu.dot_dimension_numbers<[1], [0], [0], [1], [0, 0, 1, 1], [], []>} : vector<1x32xbf16>, vector<32x128xbf16>, vector<1x128xf32> -> vector<1x128xf32>
      %c0_96 = arith.constant 0 : index
      %c0_97 = arith.constant 0 : index
      %178 = vector.load %arg18[%c0_96, %c0_97] : memref<1x128xf32, #tpu.memory_space<vmem>>, vector<1x128xf32>
      %179 = arith.addf %177, %178 : vector<1x128xf32>
      %180 = arith.index_cast %c0_i32_81 : i32 to index
      %c0_98 = arith.constant 0 : index
      %c0_99 = arith.constant 0 : index
      %181 = vector.load %arg19[%180, %c0_98, %c0_99] : memref<1x1x128xf32, #tpu.memory_space<vmem>>, vector<1x1x128xf32>
      %182 = vector.shape_cast %181 : vector<1x1x128xf32> to vector<1x128xf32>
      %183 = vector.shape_cast %179 : vector<1x128xf32> to vector<1x1x128xf32>
      tpu.vector_store %arg19[%180, %c0_98, %c0_99], %183 {strides = array<i32>} : memref<1x1x128xf32, #tpu.memory_space<vmem>>, vector<1x1x128xf32>,
      %c1_i32_100 = arith.constant 1 : i32
    } else {
    }
    return
  }
  func.func @transform_0(%arg0: i32, %arg1: i32) -> (i32, i32, i32) {
    %c0_i32 = arith.constant 0 : i32
    %c0_i32_0 = arith.constant 0 : i32
    %c0_i32_1 = arith.constant 0 : i32
    return %arg0, %c0_i32, %c0_i32_0 : i32, i32, i32
  }
  func.func @transform_1(%arg0: i32, %arg1: i32) -> (i32, i32, i32) {
    %c0_i32 = arith.constant 0 : i32
    %c0_i32_0 = arith.constant 0 : i32
    %c0_i32_1 = arith.constant 0 : i32
    return %arg1, %c0_i32, %c0_i32_0 : i32, i32, i32
  }
  func.func @transform_2(%arg0: i32, %arg1: i32) -> (i32, i32, i32) {
    %c0_i32 = arith.constant 0 : i32
    %c0_i32_0 = arith.constant 0 : i32
    %c0_i32_1 = arith.constant 0 : i32
    return %arg1, %c0_i32, %c0_i32_0 : i32, i32, i32
  }
  func.func @transform_3(%arg0: i32, %arg1: i32) -> (i32, i32, i32) {
    %c0_i32 = arith.constant 0 : i32
    %c0_i32_0 = arith.constant 0 : i32
    %c0_i32_1 = arith.constant 0 : i32
    return %arg1, %c0_i32, %c0_i32_0 : i32, i32, i32
  }
  func.func @transform_4(%arg0: i32, %arg1: i32) -> (i32, i32, i32) {
    %c0_i32 = arith.constant 0 : i32
    %c0_i32_0 = arith.constant 0 : i32
    %c0_i32_1 = arith.constant 0 : i32
    return %arg1, %c0_i32, %c0_i32_0 : i32, i32, i32
  }
  func.func @transform_5(%arg0: i32, %arg1: i32) -> (i32, i32, i32) {
    %c0_i32 = arith.constant 0 : i32
    %c0_i32_0 = arith.constant 0 : i32
    %c0_i32_1 = arith.constant 0 : i32
    return %arg1, %c0_i32, %c0_i32_0 : i32, i32, i32
  }
  func.func @transform_6(%arg0: i32, %arg1: i32) -> (i32, i32, i32) {
    %c0_i32 = arith.constant 0 : i32
    %c0_i32_0 = arith.constant 0 : i32
    %c0_i32_1 = arith.constant 0 : i32
    return %arg1, %c0_i32, %c0_i32_0 : i32, i32, i32
  }
  func.func @transform_7(%arg0: i32, %arg1: i32) -> (i32, i32, i32) {
    %c0_i32 = arith.constant 0 : i32
    %c0_i32_0 = arith.constant 0 : i32
    %c0_i32_1 = arith.constant 0 : i32
    return %arg1, %c0_i32, %c0_i32_0 : i32, i32, i32
  }
  func.func @transform_8(%arg0: i32, %arg1: i32) -> (i32, i32, i32) {
    %c0_i32 = arith.constant 0 : i32
    %c0_i32_0 = arith.constant 0 : i32
    %c0_i32_1 = arith.constant 0 : i32
    return %arg1, %c0_i32, %c0_i32_0 : i32, i32, i32
  }
  func.func @transform_9(%arg0: i32, %arg1: i32) -> (i32, i32, i32) {
    %c0_i32 = arith.constant 0 : i32
    %c0_i32_0 = arith.constant 0 : i32
    %c0_i32_1 = arith.constant 0 : i32
    return %arg1, %c0_i32, %c0_i32_0 : i32, i32, i32
  }
  func.func @transform_10(%arg0: i32, %arg1: i32) -> (i32, i32, i32) {
    %c0_i32 = arith.constant 0 : i32
    %c0_i32_0 = arith.constant 0 : i32
    %c0_i32_1 = arith.constant 0 : i32
    return %arg1, %c0_i32, %c0_i32_0 : i32, i32, i32
  }
  func.func @transform_11(%arg0: i32, %arg1: i32) -> (i32, i32, i32) {
    %c0_i32 = arith.constant 0 : i32
    %c0_i32_0 = arith.constant 0 : i32
    %c0_i32_1 = arith.constant 0 : i32
    return %arg1, %c0_i32, %c0_i32_0 : i32, i32, i32
  }
  func.func @transform_12(%arg0: i32, %arg1: i32) -> (i32, i32, i32) {
    %c0_i32 = arith.constant 0 : i32
    %c0_i32_0 = arith.constant 0 : i32
    %c0_i32_1 = arith.constant 0 : i32
    return %arg1, %c0_i32, %c0_i32_0 : i32, i32, i32
  }
  func.func @transform_13(%arg0: i32, %arg1: i32) -> (i32, i32) {
    %c0_i32 = arith.constant 0 : i32
    %c0_i32_0 = arith.constant 0 : i32
    %c0_i32_1 = arith.constant 0 : i32
    return %c0_i32, %c0_i32_0 : i32, i32
  }
  func.func @transform_14(%arg0: i32, %arg1: i32) -> (i32, i32) {
    %c0_i32 = arith.constant 0 : i32
    %c0_i32_0 = arith.constant 0 : i32
    %c0_i32_1 = arith.constant 0 : i32
    return %c0_i32, %c0_i32_0 : i32, i32
  }
  func.func @transform_15(%arg0: i32, %arg1: i32) -> (i32, i32) {
    %c0_i32 = arith.constant 0 : i32
    %c0_i32_0 = arith.constant 0 : i32
    %c0_i32_1 = arith.constant 0 : i32
    return %c0_i32, %c0_i32_0 : i32, i32
  }
  func.func @transform_16(%arg0: i32, %arg1: i32) -> (i32, i32) {
    %c0_i32 = arith.constant 0 : i32
    %c0_i32_0 = arith.constant 0 : i32
    %c0_i32_1 = arith.constant 0 : i32
    return %c0_i32, %c0_i32_0 : i32, i32
  }
  func.func @transform_17(%arg0: i32, %arg1: i32) -> (i32, i32, i32) {
    %c0_i32 = arith.constant 0 : i32
    %c0_i32_0 = arith.constant 0 : i32
    %c0_i32_1 = arith.constant 0 : i32
    return %arg0, %c0_i32, %c0_i32_0 : i32, i32, i32
  }
}

</mosaic_0001>

<llo_original>
// kernel: vit_forward.2
$region0: #{vit_forward.2}
  #allocation0 [shape = 'u32[]', space=smem, size = 0x4, offset = 0x4, fixed_abs, tag = 'smem constant byte address 0x4 - core index']
  #allocation1 [shape = 'u32[144,128]{1,0:T(1,128)}', space=vmem, size = 0x12000, scoped, tag = 'internal scratch']
  %s0 = inlined_call_operand.vmem [shape: bf16[32,64], index: 0, kind: input, shape index: {}]
  %s1 = inlined_call_operand.vmem [shape: bf16[64,32], index: 1, kind: input, shape index: {}]
  %s2 = inlined_call_operand.vmem [shape: f32[1,32], index: 2, kind: input, shape index: {}]
  %s3 = inlined_call_operand.vmem [shape: bf16[32,32], index: 3, kind: output, shape index: {}]
  %s4 = sld [smem:[#allocation0]]
  $region22: #{vit_forward.2} parent=0
    _
  %s6 = ssub.s32 1, %s4
  %s7 = scalar_select 0, %s6, %s4
  // Predicated region
  $region2: #{vit_forward.2} parent=0 // pred_check
    _
  $region3: #{vit_forward.2} parent=0 // pred_check_branch
    %9 = sbr.rel (0) target = $region5
  $region4: #{vit_forward.2} parent=0 // pred_region
    _
  $region5: #{vit_forward.2} parent=0 // pred_fallthru
    _
  // Predicated region
  $region6: #{vit_forward.2} parent=0 // pred_check
    _
  $region7: #{vit_forward.2} parent=0 // pred_check_branch
    %11 = sbr.rel (0) target = $region9
  $region8: #{vit_forward.2} parent=0 // pred_region
    _
  $region9: #{vit_forward.2} parent=0 // pred_fallthru
    _
  // Predicated region
  $region10: #{vit_forward.2} parent=0 // pred_check
    _
  $region11: #{vit_forward.2} parent=0 // pred_check_branch
    %13 = sbr.rel (0) target = $region13
  $region12: #{vit_forward.2} parent=0 // pred_region
    _
  $region13: #{vit_forward.2} parent=0 // pred_fallthru
    _
  %v15 = vld [vmem:[%s0] sm:$0xf]
  %v16 = vld [vmem:[%s0 + $0x4] sm:$0xf]
  %v17 = vld [vmem:[%s0 + $0x8] sm:$0xf]
  %v18 = vld [vmem:[%s0 + $0xc] sm:$0xf]
  %v19 = vld [vmem:[%s1] sm:$0xf]
  %v20 = vld [vmem:[%s1 + $0x4] sm:$0xf]
  %v21 = vld [vmem:[%s1 + $0x8] sm:$0xf]
  %v22 = vld [vmem:[%s1 + $0xc] sm:$0xf]
  %v23 = vld [vmem:[%s1 + $0x10] sm:$0xf]
  %v24 = vld [vmem:[%s1 + $0x14] sm:$0xf]
  %v25 = vld [vmem:[%s1 + $0x18] sm:$0xf]
  %v26 = vld [vmem:[%s1 + $0x1c] sm:$0xf]
  %v27 = vld [vmem:[%s2] sm:$0x1]
  %v29 = vlaneseq
  %v30 = vshrl.u32 %v29, 7
  %v31 = vsub.s32 0, %v30
  %v32 = vrot.slane %v27, %v31
  %v38 = vunpack.c.l.b16 %v15
  %v39 = vunpack.c.l.b16 %v16
  %v40 = vunpack.c.l.b16 %v17
  %v41 = vunpack.c.l.b16 %v18
  %v42 = vpack.c.b16 %v39, %v38
  %v43 = vpack.c.b16 %v41, %v40
  %v52 = vunpack.c.l.b16 %v19
  %v53 = vunpack.c.l.b16 %v20
  %v54 = vunpack.c.l.b16 %v21
  %v55 = vunpack.c.l.b16 %v22
  %v56 = vunpack.c.l.b16 %v23
  %v57 = vunpack.c.l.b16 %v24
  %v58 = vunpack.c.l.b16 %v25
  %v59 = vunpack.c.l.b16 %v26
  %v60 = vpack.c.b16 %v53, %v52
  %v61 = vpack.c.b16 %v55, %v54
  %v62 = vpack.c.b16 %v57, %v56
  %v63 = vpack.c.b16 %v59, %v58
  %vm68 = vcmask 523264
  %v70 = vsel %vm68, %v42, 0
  %v73 = vsel %vm68, %v43, 0
  %75 = vmatprep.subr.bf16.mxu0 0
  %76 = vmatpush1.bf16.msra.mxu0 0
  %77 = vmatprep.subr.bf16.mxu0 0
  %78 = vmatpush1.bf16.msra.mxu0 0
  %79 = vmatprep.subr.bf16.mxu0 0
  %80 = vmatpush1.bf16.msra.mxu0 0
  %81 = vmatprep.subr.bf16.mxu0 0
  %82 = vmatpush1.bf16.msra.mxu0 0
  %83 = vmatprep.subr.bf16.mxu0 0
  %84 = vmatpush1.bf16.msra.mxu0 %v63
  %85 = vmatprep.subr.bf16.mxu0 0
  %86 = vmatpush1.bf16.msra.mxu0 %v62
  %87 = vmatprep.subr.bf16.mxu0 0
  %88 = vmatpush1.bf16.msra.mxu0 %v61
  %89 = vmatprep.subr.bf16.mxu0 0
  %90 = vmatpush1.bf16.msra.mxu0 %v60
  %91 = vmatprep.subr.bf16.mxu0 0
  %92 = vmatpush2.bf16.msra.mxu0 0
  %93 = vmatprep.subr.bf16.mxu0 0
  %94 = vmatpush2.bf16.msra.mxu0 0
  %95 = vmatprep.subr.bf16.mxu0 0
  %96 = vmatpush2.bf16.msra.mxu0 0
  %97 = vmatprep.subr.bf16.mxu0 0
  %98 = vmatpush2.bf16.msra.mxu0 0
  %99 = vmatprep.subr.bf16.mxu0 0
  %100 = vmatpush2.bf16.msra.mxu0 0
  %101 = vmatprep.subr.bf16.mxu0 0
  %102 = vmatpush2.bf16.msra.mxu0 0
  %103 = vmatprep.subr.bf16.mxu0 0
  %104 = vmatpush2.bf16.msra.mxu0 0
  %105 = vmatprep.subr.bf16.mxu0 0
  %106 = vmatpush2.bf16.msra.mxu0 0
  %107 = vmatprep.mubr.bf16.mxu0 0
  %108 = vmatmul.mubr.bf16.gmra.mxu0 %v70
  %v109 = vpop.f32.mrf.mxu0
  %v110 = vadd.f32 %v32, %v109
  %v111 = vpop.f32.mrf.mxu0
  %v112 = vpop.f32.mrf.mxu0
  %v113 = vadd.f32 %v32, %v112
  %v114 = vpop.f32.mrf.mxu0
  %115 = vmatprep.mubr.bf16.mxu0 0
  %116 = vmatmul.mubr.bf16.gmra.mxu0 %v73
  %v117 = vpop.f32.mrf.mxu0
  %v118 = vadd.f32 %v32, %v117
  %v119 = vpop.f32.mrf.mxu0
  %v120 = vpop.f32.mrf.mxu0
  %v121 = vadd.f32 %v32, %v120
  %v122 = vpop.f32.mrf.mxu0
  %123 = vdwg.mxu0
  %v124 = vpack.c.bf16 %v113, %v110
  %v125 = vpack.c.bf16 %v121, %v118
  %v128 = vunpack.c.l.b16 %v124
  %v129 = vunpack.c.h.b16 %v124
  %v130 = vunpack.c.l.b16 %v125
  %v131 = vunpack.c.h.b16 %v125
  %v132 = vpack.c.b16 %v128, %v128
  %v133 = vpack.c.b16 %v129, %v129
  %v134 = vpack.c.b16 %v130, %v130
  %v135 = vpack.c.b16 %v131, %v131
  %vm140 = vcmask 257024
  %141 = vst.msk [vmem:[%s3] sm:$0xf] %vm140, %v132
  %142 = vst.msk [vmem:[%s3 + $0x4] sm:$0xf] %vm140, %v133
  %143 = vst.msk [vmem:[%s3 + $0x8] sm:$0xf] %vm140, %v134
  %144 = vst.msk [vmem:[%s3 + $0xc] sm:$0xf] %vm140, %v135
  // Predicated region
  $region14: #{vit_forward.2} parent=0 // pred_check
    _
  $region15: #{vit_forward.2} parent=0 // pred_check_branch
    %146 = sbr.rel (0) target = $region17
  $region16: #{vit_forward.2} parent=0 // pred_region
    _
  $region17: #{vit_forward.2} parent=0 // pred_fallthru
    _
  // Predicated region
  $region18: #{vit_forward.2} parent=0 // pred_check
    _
  $region19: #{vit_forward.2} parent=0 // pred_check_branch
    %148 = sbr.rel (0) target = $region21
  $region20: #{vit_forward.2} parent=0 // pred_region
    _
  $region21: #{vit_forward.2} parent=0 // pred_fallthru
    _

// kernel: vit_forward.3
$region0: #{vit_forward.3}
  #allocation0 [shape = 'u32[]', space=smem, size = 0x4, offset = 0x4, fixed_abs, tag = 'smem constant byte address 0x4 - core index']
  #allocation1 [shape = 'u32[144,128]{1,0:T(1,128)}', space=vmem, size = 0x12000, scoped, tag = 'internal scratch']
  #allocation2 [shape = 'f32[1,18,32]{2,1,0:T(8,128)}', space=vmem, size = 0x3000, scoped, tag = 'scratch operand']
  #allocation3 [shape = 'bf16[18,96]{1,0:T(8,128)(2,1)}', space=vmem, size = 0x1800, scoped, tag = 'scratch operand']
  #allocation4 [shape = 'bf16[18,32]{1,0:T(8,128)(2,1)}', space=vmem, size = 0x1800, scoped, tag = 'scratch operand']
  %s0 = inlined_call_operand.vmem [shape: bf16[2,18,32], index: 0, kind: input, shape index: {}]
  %s1 = inlined_call_operand.vmem [shape: f32[2,1,32], index: 1, kind: input, shape index: {}]
  %s2 = inlined_call_operand.vmem [shape: f32[2,1,32], index: 2, kind: input, shape index: {}]
  %s3 = inlined_call_operand.vmem [shape: bf16[2,32,96], index: 3, kind: input, shape index: {}]
  %s4 = inlined_call_operand.vmem [shape: f32[2,1,96], index: 4, kind: input, shape index: {}]
  %s5 = inlined_call_operand.vmem [shape: bf16[2,32,32], index: 5, kind: input, shape index: {}]
  %s6 = inlined_call_operand.vmem [shape: f32[2,1,32], index: 6, kind: input, shape index: {}]
  %s7 = inlined_call_operand.vmem [shape: f32[2,1,32], index: 7, kind: input, shape index: {}]
  %s8 = inlined_call_operand.vmem [shape: f32[2,1,32], index: 8, kind: input, shape index: {}]
  %s9 = inlined_call_operand.vmem [shape: bf16[2,32,64], index: 9, kind: input, shape index: {}]
  %s10 = inlined_call_operand.vmem [shape: f32[2,1,64], index: 10, kind: input, shape index: {}]
  %s11 = inlined_call_operand.vmem [shape: bf16[2,64,32], index: 11, kind: input, shape index: {}]
  %s12 = inlined_call_operand.vmem [shape: f32[2,1,32], index: 12, kind: input, shape index: {}]
  %s13 = inlined_call_operand.vmem [shape: f32[1,32], index: 13, kind: input, shape index: {}]
  %s14 = inlined_call_operand.vmem [shape: f32[1,32], index: 14, kind: input, shape index: {}]
  %s15 = inlined_call_operand.vmem [shape: bf16[32,128], index: 15, kind: input, shape index: {}]
  %s16 = inlined_call_operand.vmem [shape: f32[1,128], index: 16, kind: input, shape index: {}]
  %s17 = inlined_call_operand.hbm [shape: f32[2,1,128], index: 17, kind: output, shape index: {}]
  %s18 = sld [smem:[#allocation0]]
  $region109: #{vit_forward.3} parent=0
    _
  %s20 = ssub.s32 1, %s18
  %s21 = scalar_select 0, %s20, %s18
  $region1: #{vit_forward.3} parent=0
    #allocation5 [shape = 'u8[1024]{0}', space=vmem, size = 0x400, scoped, tag = 'output window, operand 0']
    #allocation6 [shape = 's32[2]{0}', space=sflag, size = 0x8, scoped, tag = 'scoped memory for vit_forward.3']
    %22 = vsyncpa [#allocation6], 0
    %s23 = scalar_lea.sflag [#allocation6], 1
    %24 = vsyncpa %s23, 0
    loop: start=0, step=1, limit=6
    $region2: #{vit_forward.3} parent=1 // loop_pre_header
      _
    $region3: #{vit_forward.3} parent=1 // loop_header
      %s26 = sphi 0, %s30
      %p27 = scmp.ge.s32.totalorder %s26, 6
      %s33 = sphi 0, %s45
      %s34 = sphi 0, %s41
      %s35 = sphi 0, %s33
      %s36 = sphi 0, %s34
      %s37 = sphi 0, %s35
      %s38 = sphi 0, %s36
      %s48 = sphi 0, %s50
      %s51 = sphi 0, %s48
      %s52 = sphi 0, %s51
      %s68 = sphi 0, %s52
      %s74 = sphi 0, %s76
      %s77 = sphi 0, %s74
      %s78 = sphi 0, %s77
      %s94 = sphi 0, %s78
      %s100 = sphi 0, %s102
      %s103 = sphi 0, %s100
      %s104 = sphi 0, %s103
      %s120 = sphi 0, %s104
      %s126 = sphi 0, %s128
      %s129 = sphi 0, %s126
      %s130 = sphi 0, %s129
      %s146 = sphi 0, %s130
      %s152 = sphi 0, %s154
      %s155 = sphi 0, %s152
      %s156 = sphi 0, %s155
      %s172 = sphi 0, %s156
      %s178 = sphi 0, %s180
      %s181 = sphi 0, %s178
      %s182 = sphi 0, %s181
      %s198 = sphi 0, %s182
      %s204 = sphi 0, %s206
      %s207 = sphi 0, %s204
      %s208 = sphi 0, %s207
      %s224 = sphi 0, %s208
      %s230 = sphi 0, %s232
      %s233 = sphi 0, %s230
      %s234 = sphi 0, %s233
      %s250 = sphi 0, %s234
      %s256 = sphi 0, %s258
      %s259 = sphi 0, %s256
      %s260 = sphi 0, %s259
      %s276 = sphi 0, %s260
      %s282 = sphi 0, %s284
      %s285 = sphi 0, %s282
      %s286 = sphi 0, %s285
      %s302 = sphi 0, %s286
      %s308 = sphi 0, %s310
      %s311 = sphi 0, %s308
      %s312 = sphi 0, %s311
      %s328 = sphi 0, %s312
      %s334 = sphi 0, %s336
      %s337 = sphi 0, %s334
      %s338 = sphi 0, %s337
      %s354 = sphi 0, %s338
      %s360 = sphi 0, %s362
      %s363 = sphi 0, %s360
      %s364 = sphi 0, %s363
      %s380 = sphi 0, %s364
      %s384 = sphi 0, %s384
      %s386 = sphi 0, %s384
      %s387 = sphi 0, %s386
      %s401 = sphi 0, %s387
      %s405 = sphi 0, %s405
      %s407 = sphi 0, %s405
      %s408 = sphi 0, %s407
      %s422 = sphi 0, %s408
      %s426 = sphi 0, %s426
      %s428 = sphi 0, %s426
      %s429 = sphi 0, %s428
      %s443 = sphi 0, %s429
      %s447 = sphi 0, %s447
      %s449 = sphi 0, %s447
      %s450 = sphi 0, %s449
      %s464 = sphi 0, %s450
      %s470 = sphi 0, %s472
      %s473 = sphi 0, %s470
      %s474 = sphi 0, %s473
      %s490 = sphi 0, %s474
    $region4: #{vit_forward.3} parent=1 // loop_header_branch
      %29 = sbr.rel (%p27) target = $region8
    $region5: #{vit_forward.3} parent=1 // loop_body
      %s31 = ssub.s32 %s26, 1
      %s32 = ssub.s32 %s26, 2
      %s39 = sadd.s32 1, %s34
      %p40 = scmp.ge.s32.totalorder %s39, 2
      %s41 = scalar_select %p40, 0, %s39
      %s42 = sadd.s32 1, %s33
      %s43 = scalar_select %p40, %s42, %s33
      %p44 = scmp.ge.s32.totalorder %s43, 2
      %s45 = scalar_select %p44, 0, %s43
      %s46 = ssub.s32 %s33, %s45
      %p47 = scmp.eq.s32.totalorder %s46, 0
      %s49 = sadd.s32 %s48, 1
      %s50 = scalar_select %p47, %s48, %s49
      %p53 = pneg %p47
      %p54 = scmp.eq.s32.totalorder %s26, 3
      %p55 = por %p53, %p54
      %p56 = scmp.ne.s32.totalorder %s48, %s51
      %p57 = scmp.eq.s32.totalorder %s26, 0
      %p58 = por %p56, %p57
      %p59 = scmp.ne.s32.totalorder %s48, %s51
      %p60 = scmp.eq.s32.totalorder %s31, 3
      %p61 = por %p59, %p60
      %p62 = scmp.ne.s32.totalorder %s51, %s52
      %p63 = scmp.eq.s32.totalorder %s31, 0
      %p64 = por %p62, %p63
      %p65 = scmp.ne.s32.totalorder %s51, %s52
      %p66 = scmp.eq.s32.totalorder %s32, 3
      %p67 = por %p65, %p66
      %p69 = scmp.ne.s32.totalorder %s52, %s68
      %p70 = scmp.eq.s32.totalorder %s32, 0
      %p71 = por %p69, %p70
      %s72 = ssub.s32 %s34, %s41
      %p73 = scmp.eq.s32.totalorder %s72, 0
      %s75 = sadd.s32 %s74, 1
      %s76 = scalar_select %p73, %s74, %s75
      %p79 = pneg %p73
      %p80 = scmp.eq.s32.totalorder %s26, 3
      %p81 = por %p79, %p80
      %p82 = scmp.ne.s32.totalorder %s74, %s77
      %p83 = scmp.eq.s32.totalorder %s26, 0
      %p84 = por %p82, %p83
      %p85 = scmp.ne.s32.totalorder %s74, %s77
      %p86 = scmp.eq.s32.totalorder %s31, 3
      %p87 = por %p85, %p86
      %p88 = scmp.ne.s32.totalorder %s77, %s78
      %p89 = scmp.eq.s32.totalorder %s31, 0
      %p90 = por %p88, %p89
      %p91 = scmp.ne.s32.totalorder %s77, %s78
      %p92 = scmp.eq.s32.totalorder %s32, 3
      %p93 = por %p91, %p92
      %p95 = scmp.ne.s32.totalorder %s78, %s94
      %p96 = scmp.eq.s32.totalorder %s32, 0
      %p97 = por %p95, %p96
      %s98 = ssub.s32 %s34, %s41
      %p99 = scmp.eq.s32.totalorder %s98, 0
      %s101 = sadd.s32 %s100, 1
      %s102 = scalar_select %p99, %s100, %s101
      %p105 = pneg %p99
      %p106 = scmp.eq.s32.totalorder %s26, 3
      %p107 = por %p105, %p106
      %p108 = scmp.ne.s32.totalorder %s100, %s103
      %p109 = scmp.eq.s32.totalorder %s26, 0
      %p110 = por %p108, %p109
      %p111 = scmp.ne.s32.totalorder %s100, %s103
      %p112 = scmp.eq.s32.totalorder %s31, 3
      %p113 = por %p111, %p112
      %p114 = scmp.ne.s32.totalorder %s103, %s104
      %p115 = scmp.eq.s32.totalorder %s31, 0
      %p116 = por %p114, %p115
      %p117 = scmp.ne.s32.totalorder %s103, %s104
      %p118 = scmp.eq.s32.totalorder %s32, 3
      %p119 = por %p117, %p118
      %p121 = scmp.ne.s32.totalorder %s104, %s120
      %p122 = scmp.eq.s32.totalorder %s32, 0
      %p123 = por %p121, %p122
      %s124 = ssub.s32 %s34, %s41
      %p125 = scmp.eq.s32.totalorder %s124, 0
      %s127 = sadd.s32 %s126, 1
      %s128 = scalar_select %p125, %s126, %s127
      %p131 = pneg %p125
      %p132 = scmp.eq.s32.totalorder %s26, 3
      %p133 = por %p131, %p132
      %p134 = scmp.ne.s32.totalorder %s126, %s129
      %p135 = scmp.eq.s32.totalorder %s26, 0
      %p136 = por %p134, %p135
      %p137 = scmp.ne.s32.totalorder %s126, %s129
      %p138 = scmp.eq.s32.totalorder %s31, 3
      %p139 = por %p137, %p138
      %p140 = scmp.ne.s32.totalorder %s129, %s130
      %p141 = scmp.eq.s32.totalorder %s31, 0
      %p142 = por %p140, %p141
      %p143 = scmp.ne.s32.totalorder %s129, %s130
      %p144 = scmp.eq.s32.totalorder %s32, 3
      %p145 = por %p143, %p144
      %p147 = scmp.ne.s32.totalorder %s130, %s146
      %p148 = scmp.eq.s32.totalorder %s32, 0
      %p149 = por %p147, %p148
      %s150 = ssub.s32 %s34, %s41
      %p151 = scmp.eq.s32.totalorder %s150, 0
      %s153 = sadd.s32 %s152, 1
      %s154 = scalar_select %p151, %s152, %s153
      %p157 = pneg %p151
      %p158 = scmp.eq.s32.totalorder %s26, 3
      %p159 = por %p157, %p158
      %p160 = scmp.ne.s32.totalorder %s152, %s155
      %p161 = scmp.eq.s32.totalorder %s26, 0
      %p162 = por %p160, %p161
      %p163 = scmp.ne.s32.totalorder %s152, %s155
      %p164 = scmp.eq.s32.totalorder %s31, 3
      %p165 = por %p163, %p164
      %p166 = scmp.ne.s32.totalorder %s155, %s156
      %p167 = scmp.eq.s32.totalorder %s31, 0
      %p168 = por %p166, %p167
      %p169 = scmp.ne.s32.totalorder %s155, %s156
      %p170 = scmp.eq.s32.totalorder %s32, 3
      %p171 = por %p169, %p170
      %p173 = scmp.ne.s32.totalorder %s156, %s172
      %p174 = scmp.eq.s32.totalorder %s32, 0
      %p175 = por %p173, %p174
      %s176 = ssub.s32 %s34, %s41
      %p177 = scmp.eq.s32.totalorder %s176, 0
      %s179 = sadd.s32 %s178, 1
      %s180 = scalar_select %p177, %s178, %s179
      %p183 = pneg %p177
      %p184 = scmp.eq.s32.totalorder %s26, 3
      %p185 = por %p183, %p184
      %p186 = scmp.ne.s32.totalorder %s178, %s181
      %p187 = scmp.eq.s32.totalorder %s26, 0
      %p188 = por %p186, %p187
      %p189 = scmp.ne.s32.totalorder %s178, %s181
      %p190 = scmp.eq.s32.totalorder %s31, 3
      %p191 = por %p189, %p190
      %p192 = scmp.ne.s32.totalorder %s181, %s182
      %p193 = scmp.eq.s32.totalorder %s31, 0
      %p194 = por %p192, %p193
      %p195 = scmp.ne.s32.totalorder %s181, %s182
      %p196 = scmp.eq.s32.totalorder %s32, 3
      %p197 = por %p195, %p196
      %p199 = scmp.ne.s32.totalorder %s182, %s198
      %p200 = scmp.eq.s32.totalorder %s32, 0
      %p201 = por %p199, %p200
      %s202 = ssub.s32 %s34, %s41
      %p203 = scmp.eq.s32.totalorder %s202, 0
      %s205 = sadd.s32 %s204, 1
      %s206 = scalar_select %p203, %s204, %s205
      %p209 = pneg %p203
      %p210 = scmp.eq.s32.totalorder %s26, 3
      %p211 = por %p209, %p210
      %p212 = scmp.ne.s32.totalorder %s204, %s207
      %p213 = scmp.eq.s32.totalorder %s26, 0
      %p214 = por %p212, %p213
      %p215 = scmp.ne.s32.totalorder %s204, %s207
      %p216 = scmp.eq.s32.totalorder %s31, 3
      %p217 = por %p215, %p216
      %p218 = scmp.ne.s32.totalorder %s207, %s208
      %p219 = scmp.eq.s32.totalorder %s31, 0
      %p220 = por %p218, %p219
      %p221 = scmp.ne.s32.totalorder %s207, %s208
      %p222 = scmp.eq.s32.totalorder %s32, 3
      %p223 = por %p221, %p222
      %p225 = scmp.ne.s32.totalorder %s208, %s224
      %p226 = scmp.eq.s32.totalorder %s32, 0
      %p227 = por %p225, %p226
      %s228 = ssub.s32 %s34, %s41
      %p229 = scmp.eq.s32.totalorder %s228, 0
      %s231 = sadd.s32 %s230, 1
      %s232 = scalar_select %p229, %s230, %s231
      %p235 = pneg %p229
      %p236 = scmp.eq.s32.totalorder %s26, 3
      %p237 = por %p235, %p236
      %p238 = scmp.ne.s32.totalorder %s230, %s233
      %p239 = scmp.eq.s32.totalorder %s26, 0
      %p240 = por %p238, %p239
      %p241 = scmp.ne.s32.totalorder %s230, %s233
      %p242 = scmp.eq.s32.totalorder %s31, 3
      %p243 = por %p241, %p242
      %p244 = scmp.ne.s32.totalorder %s233, %s234
      %p245 = scmp.eq.s32.totalorder %s31, 0
      %p246 = por %p244, %p245
      %p247 = scmp.ne.s32.totalorder %s233, %s234
      %p248 = scmp.eq.s32.totalorder %s32, 3
      %p249 = por %p247, %p248
      %p251 = scmp.ne.s32.totalorder %s234, %s250
      %p252 = scmp.eq.s32.totalorder %s32, 0
      %p253 = por %p251, %p252
      %s254 = ssub.s32 %s34, %s41
      %p255 = scmp.eq.s32.totalorder %s254, 0
      %s257 = sadd.s32 %s256, 1
      %s258 = scalar_select %p255, %s256, %s257
      %p261 = pneg %p255
      %p262 = scmp.eq.s32.totalorder %s26, 3
      %p263 = por %p261, %p262
      %p264 = scmp.ne.s32.totalorder %s256, %s259
      %p265 = scmp.eq.s32.totalorder %s26, 0
      %p266 = por %p264, %p265
      %p267 = scmp.ne.s32.totalorder %s256, %s259
      %p268 = scmp.eq.s32.totalorder %s31, 3
      %p269 = por %p267, %p268
      %p270 = scmp.ne.s32.totalorder %s259, %s260
      %p271 = scmp.eq.s32.totalorder %s31, 0
      %p272 = por %p270, %p271
      %p273 = scmp.ne.s32.totalorder %s259, %s260
      %p274 = scmp.eq.s32.totalorder %s32, 3
      %p275 = por %p273, %p274
      %p277 = scmp.ne.s32.totalorder %s260, %s276
      %p278 = scmp.eq.s32.totalorder %s32, 0
      %p279 = por %p277, %p278
      %s280 = ssub.s32 %s34, %s41
      %p281 = scmp.eq.s32.totalorder %s280, 0
      %s283 = sadd.s32 %s282, 1
      %s284 = scalar_select %p281, %s282, %s283
      %p287 = pneg %p281
      %p288 = scmp.eq.s32.totalorder %s26, 3
      %p289 = por %p287, %p288
      %p290 = scmp.ne.s32.totalorder %s282, %s285
      %p291 = scmp.eq.s32.totalorder %s26, 0
      %p292 = por %p290, %p291
      %p293 = scmp.ne.s32.totalorder %s282, %s285
      %p294 = scmp.eq.s32.totalorder %s31, 3
      %p295 = por %p293, %p294
      %p296 = scmp.ne.s32.totalorder %s285, %s286
      %p297 = scmp.eq.s32.totalorder %s31, 0
      %p298 = por %p296, %p297
      %p299 = scmp.ne.s32.totalorder %s285, %s286
      %p300 = scmp.eq.s32.totalorder %s32, 3
      %p301 = por %p299, %p300
      %p303 = scmp.ne.s32.totalorder %s286, %s302
      %p304 = scmp.eq.s32.totalorder %s32, 0
      %p305 = por %p303, %p304
      %s306 = ssub.s32 %s34, %s41
      %p307 = scmp.eq.s32.totalorder %s306, 0
      %s309 = sadd.s32 %s308, 1
      %s310 = scalar_select %p307, %s308, %s309
      %p313 = pneg %p307
      %p314 = scmp.eq.s32.totalorder %s26, 3
      %p315 = por %p313, %p314
      %p316 = scmp.ne.s32.totalorder %s308, %s311
      %p317 = scmp.eq.s32.totalorder %s26, 0
      %p318 = por %p316, %p317
      %p319 = scmp.ne.s32.totalorder %s308, %s311
      %p320 = scmp.eq.s32.totalorder %s31, 3
      %p321 = por %p319, %p320
      %p322 = scmp.ne.s32.totalorder %s311, %s312
      %p323 = scmp.eq.s32.totalorder %s31, 0
      %p324 = por %p322, %p323
      %p325 = scmp.ne.s32.totalorder %s311, %s312
      %p326 = scmp.eq.s32.totalorder %s32, 3
      %p327 = por %p325, %p326
      %p329 = scmp.ne.s32.totalorder %s312, %s328
      %p330 = scmp.eq.s32.totalorder %s32, 0
      %p331 = por %p329, %p330
      %s332 = ssub.s32 %s34, %s41
      %p333 = scmp.eq.s32.totalorder %s332, 0
      %s335 = sadd.s32 %s334, 1
      %s336 = scalar_select %p333, %s334, %s335
      %p339 = pneg %p333
      %p340 = scmp.eq.s32.totalorder %s26, 3
      %p341 = por %p339, %p340
      %p342 = scmp.ne.s32.totalorder %s334, %s337
      %p343 = scmp.eq.s32.totalorder %s26, 0
      %p344 = por %p342, %p343
      %p345 = scmp.ne.s32.totalorder %s334, %s337
      %p346 = scmp.eq.s32.totalorder %s31, 3
      %p347 = por %p345, %p346
      %p348 = scmp.ne.s32.totalorder %s337, %s338
      %p349 = scmp.eq.s32.totalorder %s31, 0
      %p350 = por %p348, %p349
      %p351 = scmp.ne.s32.totalorder %s337, %s338
      %p352 = scmp.eq.s32.totalorder %s32, 3
      %p353 = por %p351, %p352
      %p355 = scmp.ne.s32.totalorder %s338, %s354
      %p356 = scmp.eq.s32.totalorder %s32, 0
      %p357 = por %p355, %p356
      %s358 = ssub.s32 %s34, %s41
      %p359 = scmp.eq.s32.totalorder %s358, 0
      %s361 = sadd.s32 %s360, 1
      %s362 = scalar_select %p359, %s360, %s361
      %p365 = pneg %p359
      %p366 = scmp.eq.s32.totalorder %s26, 3
      %p367 = por %p365, %p366
      %p368 = scmp.ne.s32.totalorder %s360, %s363
      %p369 = scmp.eq.s32.totalorder %s26, 0
      %p370 = por %p368, %p369
      %p371 = scmp.ne.s32.totalorder %s360, %s363
      %p372 = scmp.eq.s32.totalorder %s31, 3
      %p373 = por %p371, %p372
      %p374 = scmp.ne.s32.totalorder %s363, %s364
      %p375 = scmp.eq.s32.totalorder %s31, 0
      %p376 = por %p374, %p375
      %p377 = scmp.ne.s32.totalorder %s363, %s364
      %p378 = scmp.eq.s32.totalorder %s32, 3
      %p379 = por %p377, %p378
      %p381 = scmp.ne.s32.totalorder %s364, %s380
      %p382 = scmp.eq.s32.totalorder %s32, 0
      %p383 = por %p381, %p382
      %s385 = sadd.s32 %s384, 1
      %p388 = scmp.eq.s32.totalorder %s26, 3
      %p389 = scmp.ne.s32.totalorder %s384, %s386
      %p390 = scmp.eq.s32.totalorder %s26, 0
      %p391 = por %p389, %p390
      %p392 = scmp.ne.s32.totalorder %s384, %s386
      %p393 = scmp.eq.s32.totalorder %s31, 3
      %p394 = por %p392, %p393
      %p395 = scmp.ne.s32.totalorder %s386, %s387
      %p396 = scmp.eq.s32.totalorder %s31, 0
      %p397 = por %p395, %p396
      %p398 = scmp.ne.s32.totalorder %s386, %s387
      %p399 = scmp.eq.s32.totalorder %s32, 3
      %p400 = por %p398, %p399
      %p402 = scmp.ne.s32.totalorder %s387, %s401
      %p403 = scmp.eq.s32.totalorder %s32, 0
      %p404 = por %p402, %p403
      %s406 = sadd.s32 %s405, 1
      %p409 = scmp.eq.s32.totalorder %s26, 3
      %p410 = scmp.ne.s32.totalorder %s405, %s407
      %p411 = scmp.eq.s32.totalorder %s26, 0
      %p412 = por %p410, %p411
      %p413 = scmp.ne.s32.totalorder %s405, %s407
      %p414 = scmp.eq.s32.totalorder %s31, 3
      %p415 = por %p413, %p414
      %p416 = scmp.ne.s32.totalorder %s407, %s408
      %p417 = scmp.eq.s32.totalorder %s31, 0
      %p418 = por %p416, %p417
      %p419 = scmp.ne.s32.totalorder %s407, %s408
      %p420 = scmp.eq.s32.totalorder %s32, 3
      %p421 = por %p419, %p420
      %p423 = scmp.ne.s32.totalorder %s408, %s422
      %p424 = scmp.eq.s32.totalorder %s32, 0
      %p425 = por %p423, %p424
      %s427 = sadd.s32 %s426, 1
      %p430 = scmp.eq.s32.totalorder %s26, 3
      %p431 = scmp.ne.s32.totalorder %s426, %s428
      %p432 = scmp.eq.s32.totalorder %s26, 0
      %p433 = por %p431, %p432
      %p434 = scmp.ne.s32.totalorder %s426, %s428
      %p435 = scmp.eq.s32.totalorder %s31, 3
      %p436 = por %p434, %p435
      %p437 = scmp.ne.s32.totalorder %s428, %s429
      %p438 = scmp.eq.s32.totalorder %s31, 0
      %p439 = por %p437, %p438
      %p440 = scmp.ne.s32.totalorder %s428, %s429
      %p441 = scmp.eq.s32.totalorder %s32, 3
      %p442 = por %p440, %p441
      %p444 = scmp.ne.s32.totalorder %s429, %s443
      %p445 = scmp.eq.s32.totalorder %s32, 0
      %p446 = por %p444, %p445
      %s448 = sadd.s32 %s447, 1
      %p451 = scmp.eq.s32.totalorder %s26, 3
      %p452 = scmp.ne.s32.totalorder %s447, %s449
      %p453 = scmp.eq.s32.totalorder %s26, 0
      %p454 = por %p452, %p453
      %p455 = scmp.ne.s32.totalorder %s447, %s449
      %p456 = scmp.eq.s32.totalorder %s31, 3
      %p457 = por %p455, %p456
      %p458 = scmp.ne.s32.totalorder %s449, %s450
      %p459 = scmp.eq.s32.totalorder %s31, 0
      %p460 = por %p458, %p459
      %p461 = scmp.ne.s32.totalorder %s449, %s450
      %p462 = scmp.eq.s32.totalorder %s32, 3
      %p463 = por %p461, %p462
      %p465 = scmp.ne.s32.totalorder %s450, %s464
      %p466 = scmp.eq.s32.totalorder %s32, 0
      %p467 = por %p465, %p466
      %s468 = ssub.s32 %s33, %s45
      %p469 = scmp.eq.s32.totalorder %s468, 0
      %s471 = sadd.s32 %s470, 1
      %s472 = scalar_select %p469, %s470, %s471
      %p475 = pneg %p469
      %p476 = scmp.eq.s32.totalorder %s26, 3
      %p477 = por %p475, %p476
      %p478 = scmp.ne.s32.totalorder %s470, %s473
      %p479 = scmp.eq.s32.totalorder %s26, 0
      %p480 = por %p478, %p479
      %p481 = scmp.ne.s32.totalorder %s470, %s473
      %p482 = scmp.eq.s32.totalorder %s31, 3
      %p483 = por %p481, %p482
      %p484 = scmp.ne.s32.totalorder %s473, %s474
      %p485 = scmp.eq.s32.totalorder %s31, 0
      %p486 = por %p484, %p485
      %p487 = scmp.ne.s32.totalorder %s473, %s474
      %p488 = scmp.eq.s32.totalorder %s32, 3
      %p489 = por %p487, %p488
      %p491 = scmp.ne.s32.totalorder %s474, %s490
      %p492 = scmp.eq.s32.totalorder %s32, 0
      %p493 = por %p491, %p492
      %p494 = scmp.le.s32.totalorder 1, %s26
      %p495 = scmp.lt.s32.totalorder %s26, 5
      %p496 = pnand %p494, %p495
      %p497 = pneg %p496
      // Predicated region
      $region9: #{vit_forward.3} parent=5 // pred_check
        _
      $region10: #{vit_forward.3} parent=5 // pred_check_branch
        %499 = sbr.rel (%p496) target = $region12
      $region11: #{vit_forward.3} parent=5 // pred_region
        %s500 = ssub.s32 %s26, 1
        // Predicated region
        $region13: #{vit_forward.3} parent=11 // pred_check
          %p501 = pneg %p397
        $region14: #{vit_forward.3} parent=11 // pred_check_branch
          %503 = sbr.rel (%p501) target = $region16
        $region15: #{vit_forward.3} parent=11 // pred_region
          _
        $region16: #{vit_forward.3} parent=11 // pred_fallthru
          _
        // Predicated region
        $region17: #{vit_forward.3} parent=11 // pred_check
          %p504 = pneg %p418
        $region18: #{vit_forward.3} parent=11 // pred_check_branch
          %506 = sbr.rel (%p504) target = $region20
        $region19: #{vit_forward.3} parent=11 // pred_region
          _
        $region20: #{vit_forward.3} parent=11 // pred_fallthru
          _
        // Predicated region
        $region21: #{vit_forward.3} parent=11 // pred_check
          %p507 = pneg %p439
        $region22: #{vit_forward.3} parent=11 // pred_check_branch
          %509 = sbr.rel (%p507) target = $region24
        $region23: #{vit_forward.3} parent=11 // pred_region
          _
        $region24: #{vit_forward.3} parent=11 // pred_fallthru
          _
        // Predicated region
        $region25: #{vit_forward.3} parent=11 // pred_check
          %p510 = pneg %p460
        $region26: #{vit_forward.3} parent=11 // pred_check_branch
          %512 = sbr.rel (%p510) target = $region28
        $region27: #{vit_forward.3} parent=11 // pred_region
          _
        $region28: #{vit_forward.3} parent=11 // pred_fallthru
          _
      $region12: #{vit_forward.3} parent=5 // pred_fallthru
        _
      %p513 = scmp.lt.s32.totalorder %s26, 4
      // Predicated region
      $region29: #{vit_forward.3} parent=5 // pred_check
        %p514 = pneg %p513
      $region30: #{vit_forward.3} parent=5 // pred_check_branch
        %516 = sbr.rel (%p514) target = $region32
      $region31: #{vit_forward.3} parent=5 // pred_region
        // Predicated region
        $region33: #{vit_forward.3} parent=31 // pred_check
          %p517 = pneg %p58
        $region34: #{vit_forward.3} parent=31 // pred_check_branch
          %519 = sbr.rel (%p517) target = $region36
        $region35: #{vit_forward.3} parent=31 // pred_region
          %p520 = scmp.lt.s32.totalorder %s33, 1
          %s521 = scalar_select %p520, %s33, 1
          %s522 = smul.addr %s521, 3
          %s523 = smul.addr %s522, 4
          %s524 = scalar_lea.vmem %s0, %s523
        $region36: #{vit_forward.3} parent=31 // pred_fallthru
          _
        // Predicated region
        $region37: #{vit_forward.3} parent=31 // pred_check
          %p525 = pneg %p84
        $region38: #{vit_forward.3} parent=31 // pred_check_branch
          %527 = sbr.rel (%p525) target = $region40
        $region39: #{vit_forward.3} parent=31 // pred_region
          %p528 = scmp.lt.s32.totalorder %s34, 1
          %s529 = scalar_select %p528, %s34, 1
          %s530 = scalar_lea.vmem %s1, %s529
        $region40: #{vit_forward.3} parent=31 // pred_fallthru
          _
        // Predicated region
        $region41: #{vit_forward.3} parent=31 // pred_check
          %p531 = pneg %p110
        $region42: #{vit_forward.3} parent=31 // pred_check_branch
          %533 = sbr.rel (%p531) target = $region44
        $region43: #{vit_forward.3} parent=31 // pred_region
          %p534 = scmp.lt.s32.totalorder %s34, 1
          %s535 = scalar_select %p534, %s34, 1
          %s536 = scalar_lea.vmem %s2, %s535
        $region44: #{vit_forward.3} parent=31 // pred_fallthru
          _
        // Predicated region
        $region45: #{vit_forward.3} parent=31 // pred_check
          %p537 = pneg %p136
        $region46: #{vit_forward.3} parent=31 // pred_check_branch
          %539 = sbr.rel (%p537) target = $region48
        $region47: #{vit_forward.3} parent=31 // pred_region
          %p540 = scmp.lt.s32.totalorder %s34, 1
          %s541 = scalar_select %p540, %s34, 1
          %s542 = smul.addr %s541, 4
          %s543 = smul.addr %s542, 4
          %s544 = scalar_lea.vmem %s3, %s543
        $region48: #{vit_forward.3} parent=31 // pred_fallthru
          _
        // Predicated region
        $region49: #{vit_forward.3} parent=31 // pred_check
          %p545 = pneg %p162
        $region50: #{vit_forward.3} parent=31 // pred_check_branch
          %547 = sbr.rel (%p545) target = $region52
        $region51: #{vit_forward.3} parent=31 // pred_region
          %p548 = scmp.lt.s32.totalorder %s34, 1
          %s549 = scalar_select %p548, %s34, 1
          %s550 = scalar_lea.vmem %s4, %s549
        $region52: #{vit_forward.3} parent=31 // pred_fallthru
          _
        // Predicated region
        $region53: #{vit_forward.3} parent=31 // pred_check
          %p551 = pneg %p188
        $region54: #{vit_forward.3} parent=31 // pred_check_branch
          %553 = sbr.rel (%p551) target = $region56
        $region55: #{vit_forward.3} parent=31 // pred_region
          %p554 = scmp.lt.s32.totalorder %s34, 1
          %s555 = scalar_select %p554, %s34, 1
          %s556 = smul.addr %s555, 4
          %s557 = smul.addr %s556, 4
          %s558 = scalar_lea.vmem %s5, %s557
        $region56: #{vit_forward.3} parent=31 // pred_fallthru
          _
        // Predicated region
        $region57: #{vit_forward.3} parent=31 // pred_check
          %p559 = pneg %p214
        $region58: #{vit_forward.3} parent=31 // pred_check_branch
          %561 = sbr.rel (%p559) target = $region60
        $region59: #{vit_forward.3} parent=31 // pred_region
          %p562 = scmp.lt.s32.totalorder %s34, 1
          %s563 = scalar_select %p562, %s34, 1
          %s564 = scalar_lea.vmem %s6, %s563
        $region60: #{vit_forward.3} parent=31 // pred_fallthru
          _
        // Predicated region
        $region61: #{vit_forward.3} parent=31 // pred_check
          %p565 = pneg %p240
        $region62: #{vit_forward.3} parent=31 // pred_check_branch
          %567 = sbr.rel (%p565) target = $region64
        $region63: #{vit_forward.3} parent=31 // pred_region
          %p568 = scmp.lt.s32.totalorder %s34, 1
          %s569 = scalar_select %p568, %s34, 1
          %s570 = scalar_lea.vmem %s7, %s569
        $region64: #{vit_forward.3} parent=31 // pred_fallthru
          _
        // Predicated region
        $region65: #{vit_forward.3} parent=31 // pred_check
          %p571 = pneg %p266
        $region66: #{vit_forward.3} parent=31 // pred_check_branch
          %573 = sbr.rel (%p571) target = $region68
        $region67: #{vit_forward.3} parent=31 // pred_region
          %p574 = scmp.lt.s32.totalorder %s34, 1
          %s575 = scalar_select %p574, %s34, 1
          %s576 = scalar_lea.vmem %s8, %s575
        $region68: #{vit_forward.3} parent=31 // pred_fallthru
          _
        // Predicated region
        $region69: #{vit_forward.3} parent=31 // pred_check
          %p577 = pneg %p292
        $region70: #{vit_forward.3} parent=31 // pred_check_branch
          %579 = sbr.rel (%p577) target = $region72
        $region71: #{vit_forward.3} parent=31 // pred_region
          %p580 = scmp.lt.s32.totalorder %s34, 1
          %s581 = scalar_select %p580, %s34, 1
          %s582 = smul.addr %s581, 4
          %s583 = smul.addr %s582, 4
          %s584 = scalar_lea.vmem %s9, %s583
        $region72: #{vit_forward.3} parent=31 // pred_fallthru
          _
        // Predicated region
        $region73: #{vit_forward.3} parent=31 // pred_check
          %p585 = pneg %p318
        $region74: #{vit_forward.3} parent=31 // pred_check_branch
          %587 = sbr.rel (%p585) target = $region76
        $region75: #{vit_forward.3} parent=31 // pred_region
          %p588 = scmp.lt.s32.totalorder %s34, 1
          %s589 = scalar_select %p588, %s34, 1
          %s590 = scalar_lea.vmem %s10, %s589
        $region76: #{vit_forward.3} parent=31 // pred_fallthru
          _
        // Predicated region
        $region77: #{vit_forward.3} parent=31 // pred_check
          %p591 = pneg %p344
        $region78: #{vit_forward.3} parent=31 // pred_check_branch
          %593 = sbr.rel (%p591) target = $region80
        $region79: #{vit_forward.3} parent=31 // pred_region
          %p594 = scmp.lt.s32.totalorder %s34, 1
          %s595 = scalar_select %p594, %s34, 1
          %s596 = smul.addr %s595, 8
          %s597 = smul.addr %s596, 4
          %s598 = scalar_lea.vmem %s11, %s597
        $region80: #{vit_forward.3} parent=31 // pred_fallthru
          _
        // Predicated region
        $region81: #{vit_forward.3} parent=31 // pred_check
          %p599 = pneg %p370
        $region82: #{vit_forward.3} parent=31 // pred_check_branch
          %601 = sbr.rel (%p599) target = $region84
        $region83: #{vit_forward.3} parent=31 // pred_region
          %p602 = scmp.lt.s32.totalorder %s34, 1
          %s603 = scalar_select %p602, %s34, 1
          %s604 = scalar_lea.vmem %s12, %s603
        $region84: #{vit_forward.3} parent=31 // pred_fallthru
          _
      $region32: #{vit_forward.3} parent=5 // pred_fallthru
        _
      %p605 = scmp.le.s32.totalorder 1, %s26
      %p606 = scmp.lt.s32.totalorder %s26, 5
      %p607 = pnand %p605, %p606
      %p608 = pneg %p607
      // Predicated region
      $region85: #{vit_forward.3} parent=5 // pred_check
        _
      $region86: #{vit_forward.3} parent=5 // pred_check_branch
        %610 = sbr.rel (%p607) target = $region88
      $region87: #{vit_forward.3} parent=5 // pred_region
        %s611 = ssub.s32 %s26, 1
        %p612 = scmp.lt.s32.totalorder %s35, 1
        %s613 = scalar_select %p612, %s35, 1
        %s614 = smul.addr %s613, 3
        %s615 = smul.addr %s614, 4
        %s616 = scalar_lea.vmem %s0, %s615
        %p617 = pneg %p64
        %p618 = pneg %p61
        %p619 = scmp.lt.s32.totalorder %s36, 1
        %s620 = scalar_select %p619, %s36, 1
        %s621 = scalar_lea.vmem %s1, %s620
        %p622 = pneg %p90
        %p623 = pneg %p87
        %p624 = scmp.lt.s32.totalorder %s36, 1
        %s625 = scalar_select %p624, %s36, 1
        %s626 = scalar_lea.vmem %s2, %s625
        %p627 = pneg %p116
        %p628 = pneg %p113
        %p629 = scmp.lt.s32.totalorder %s36, 1
        %s630 = scalar_select %p629, %s36, 1
        %s631 = smul.addr %s630, 4
        %s632 = smul.addr %s631, 4
        %s633 = scalar_lea.vmem %s3, %s632
        %p634 = pneg %p142
        %p635 = pneg %p139
        %p636 = scmp.lt.s32.totalorder %s36, 1
        %s637 = scalar_select %p636, %s36, 1
        %s638 = scalar_lea.vmem %s4, %s637
        %p639 = pneg %p168
        %p640 = pneg %p165
        %p641 = scmp.lt.s32.totalorder %s36, 1
        %s642 = scalar_select %p641, %s36, 1
        %s643 = smul.addr %s642, 4
        %s644 = smul.addr %s643, 4
        %s645 = scalar_lea.vmem %s5, %s644
        %p646 = pneg %p194
        %p647 = pneg %p191
        %p648 = scmp.lt.s32.totalorder %s36, 1
        %s649 = scalar_select %p648, %s36, 1
        %s650 = scalar_lea.vmem %s6, %s649
        %p651 = pneg %p220
        %p652 = pneg %p217
        %p653 = scmp.lt.s32.totalorder %s36, 1
        %s654 = scalar_select %p653, %s36, 1
        %s655 = scalar_lea.vmem %s7, %s654
        %p656 = pneg %p246
        %p657 = pneg %p243
        %p658 = scmp.lt.s32.totalorder %s36, 1
        %s659 = scalar_select %p658, %s36, 1
        %s660 = scalar_lea.vmem %s8, %s659
        %p661 = pneg %p272
        %p662 = pneg %p269
        %p663 = scmp.lt.s32.totalorder %s36, 1
        %s664 = scalar_select %p663, %s36, 1
        %s665 = smul.addr %s664, 4
        %s666 = smul.addr %s665, 4
        %s667 = scalar_lea.vmem %s9, %s666
        %p668 = pneg %p298
        %p669 = pneg %p295
        %p670 = scmp.lt.s32.totalorder %s36, 1
        %s671 = scalar_select %p670, %s36, 1
        %s672 = scalar_lea.vmem %s10, %s671
        %p673 = pneg %p324
        %p674 = pneg %p321
        %p675 = scmp.lt.s32.totalorder %s36, 1
        %s676 = scalar_select %p675, %s36, 1
        %s677 = smul.addr %s676, 8
        %s678 = smul.addr %s677, 4
        %s679 = scalar_lea.vmem %s11, %s678
        %p680 = pneg %p350
        %p681 = pneg %p347
        %p682 = scmp.lt.s32.totalorder %s36, 1
        %s683 = scalar_select %p682, %s36, 1
        %s684 = scalar_lea.vmem %s12, %s683
        %p685 = pneg %p376
        %p686 = pneg %p373
        %p687 = pneg %p397
        %p688 = pneg %p394
        %p689 = pneg %p418
        %p690 = pneg %p415
        %p691 = pneg %p439
        %p692 = pneg %p436
        %p693 = pneg %p460
        %p694 = pneg %p457
        %p695 = pneg %p486
        %p696 = pneg %p483
        %s697 = sand.u32 %s473, 1
        %s698 = scalar_lea.sflag [#allocation6], %s697
        %s699 = sand.u32 %s473, 1
        %s700 = scalar_lea.vmem [#allocation5], %s699
        %p701 = scmp.lt.s32.totalorder %s35, 1
        %s702 = scalar_select %p701, %s35, 1
        %s703 = smul.addr %s702, 3
        %s704 = smul.addr %s703, 4
        %s705 = scalar_lea.vmem %s0, %s704
        %p706 = scmp.lt.s32.totalorder %s36, 1
        %s707 = scalar_select %p706, %s36, 1
        %s708 = scalar_lea.vmem %s1, %s707
        %p709 = scmp.lt.s32.totalorder %s36, 1
        %s710 = scalar_select %p709, %s36, 1
        %s711 = scalar_lea.vmem %s2, %s710
        %p712 = scmp.lt.s32.totalorder %s36, 1
        %s713 = scalar_select %p712, %s36, 1
        %s714 = smul.addr %s713, 4
        %s715 = smul.addr %s714, 4
        %s716 = scalar_lea.vmem %s3, %s715
        %p717 = scmp.lt.s32.totalorder %s36, 1
        %s718 = scalar_select %p717, %s36, 1
        %s719 = scalar_lea.vmem %s4, %s718
        %p720 = scmp.lt.s32.totalorder %s36, 1
        %s721 = scalar_select %p720, %s36, 1
        %s722 = smul.addr %s721, 4
        %s723 = smul.addr %s722, 4
        %s724 = scalar_lea.vmem %s5, %s723
        %p725 = scmp.lt.s32.totalorder %s36, 1
        %s726 = scalar_select %p725, %s36, 1
        %s727 = scalar_lea.vmem %s6, %s726
        %p728 = scmp.lt.s32.totalorder %s36, 1
        %s729 = scalar_select %p728, %s36, 1
        %s730 = scalar_lea.vmem %s7, %s729
        %p731 = scmp.lt.s32.totalorder %s36, 1
        %s732 = scalar_select %p731, %s36, 1
        %s733 = scalar_lea.vmem %s8, %s732
        %p734 = scmp.lt.s32.totalorder %s36, 1
        %s735 = scalar_select %p734, %s36, 1
        %s736 = smul.addr %s735, 4
        %s737 = smul.addr %s736, 4
        %s738 = scalar_lea.vmem %s9, %s737
        %p739 = scmp.lt.s32.totalorder %s36, 1
        %s740 = scalar_select %p739, %s36, 1
        %s741 = scalar_lea.vmem %s10, %s740
        %p742 = scmp.lt.s32.totalorder %s36, 1
        %s743 = scalar_select %p742, %s36, 1
        %s744 = smul.addr %s743, 8
        %s745 = smul.addr %s744, 4
        %s746 = scalar_lea.vmem %s11, %s745
        %p747 = scmp.lt.s32.totalorder %s36, 1
        %s748 = scalar_select %p747, %s36, 1
        %s749 = scalar_lea.vmem %s12, %s748
        %p751 = scmp.eq.s32.totalorder %s36, 0
        // Predicated region
        $region89: #{vit_forward.3} parent=87 // pred_check
          %p752 = pneg %p751
        $region90: #{vit_forward.3} parent=87 // pred_check_branch
          %754 = sbr.rel (%p752) target = $region92
        $region91: #{vit_forward.3} parent=87 // pred_region
          %v755 = vld [vmem:[%s705] sm:$0xf]
          %v756 = vld [vmem:[%s705 + $0x4] sm:$0xf]
          %v757 = vld [vmem:[%s705 + $0x8] sm:$0x1]
          %v758 = vunpack.c.l.bf16 %v755
          %v759 = vunpack.c.l.bf16 %v756
          %v760 = vunpack.c.l.bf16 %v757
          %vm761 = vcmask 261120
          %762 = vst.msk [vmem:[#allocation2] sm:$0xff] %vm761, %v758
          %763 = vst.msk [vmem:[#allocation2 + $0x8] sm:$0xff] %vm761, %v759
          %vm764 = vcmask 254976
          %765 = vst.msk [vmem:[#allocation2 + $0x10] sm:$0x3] %vm764, %v760
        $region92: #{vit_forward.3} parent=87 // pred_fallthru
          _
        %v766 = vld [vmem:[%s708] sm:$0x1]
        %v767 = vld [vmem:[%s711] sm:$0x1]
        %v768 = vld [vmem:[%s716] sm:$0xf]
        %v769 = vld [vmem:[%s716 + $0x4] sm:$0xf]
        %v770 = vld [vmem:[%s716 + $0x8] sm:$0xf]
        %v771 = vld [vmem:[%s716 + $0xc] sm:$0xf]
        %v772 = vld [vmem:[%s719] sm:$0x1]
        %v773 = vld [vmem:[%s724] sm:$0xf]
        %v774 = vld [vmem:[%s724 + $0x4] sm:$0xf]
        %v775 = vld [vmem:[%s724 + $0x8] sm:$0xf]
        %v776 = vld [vmem:[%s724 + $0xc] sm:$0xf]
        %v777 = vld [vmem:[%s727] sm:$0x1]
        %v778 = vld [vmem:[%s730] sm:$0x1]
        %v779 = vld [vmem:[%s733] sm:$0x1]
        %v780 = vld [vmem:[%s738] sm:$0xf]
        %v781 = vld [vmem:[%s738 + $0x4] sm:$0xf]
        %v782 = vld [vmem:[%s738 + $0x8] sm:$0xf]
        %v783 = vld [vmem:[%s738 + $0xc] sm:$0xf]
        %v784 = vld [vmem:[%s741] sm:$0x1]
        %v785 = vld [vmem:[%s746] sm:$0xf]
        %v786 = vld [vmem:[%s746 + $0x4] sm:$0xf]
        %v787 = vld [vmem:[%s746 + $0x8] sm:$0xf]
        %v788 = vld [vmem:[%s746 + $0xc] sm:$0xf]
        %v789 = vld [vmem:[%s746 + $0x10] sm:$0xf]
        %v790 = vld [vmem:[%s746 + $0x14] sm:$0xf]
        %v791 = vld [vmem:[%s746 + $0x18] sm:$0xf]
        %v792 = vld [vmem:[%s746 + $0x1c] sm:$0xf]
        %v793 = vld [vmem:[%s749] sm:$0x1]
        %v794 = vld [vmem:[#allocation2] sm:$0xff]
        %v795 = vld [vmem:[#allocation2 + $0x8] sm:$0xff]
        %v796 = vld [vmem:[#allocation2 + $0x10] sm:$0x3]
        %vm797 = vcmask 261120
        %v798 = vsel %vm797, %v794, 0.0
        %799 = vadd.xlane.f32.xlu0 %v798
        %v800 = vpop.xlane.xlu0 %799
        %v801 = vsel %vm797, %v795, 0.0
        %802 = vadd.xlane.f32.xlu0 %v801
        %v803 = vpop.xlane.xlu0 %802
        %vm804 = vcmask 254976
        %v805 = vsel %vm804, %v796, 0.0
        %806 = vadd.xlane.f32.xlu0 %v805
        %v807 = vpop.xlane.xlu0 %806
        %v808 = vrcp.pop 32.0
        %v809 = vmul.f32 %v800, %v808
        %v810 = vmul.f32 %v803, %v808
        %v811 = vmul.f32 %v807, %v808
        %v812 = vsub.f32 %v794, %v809
        %v813 = vsub.f32 %v795, %v810
        %v814 = vsub.f32 %v796, %v811
        %v815 = vmul.f32 %v812, %v812
        %v816 = vmul.f32 %v813, %v813
        %v817 = vmul.f32 %v814, %v814
        %v818 = vsel %vm797, %v815, 0.0
        %819 = vadd.xlane.f32.xlu0 %v818
        %v820 = vpop.xlane.xlu0 %819
        %v821 = vsel %vm797, %v816, 0.0
        %822 = vadd.xlane.f32.xlu0 %v821
        %v823 = vpop.xlane.xlu0 %822
        %v824 = vsel %vm804, %v817, 0.0
        %825 = vadd.xlane.f32.xlu0 %v824
        %v826 = vpop.xlane.xlu0 %825
        %v827 = vmul.f32 %v820, %v808
        %v828 = vmul.f32 %v823, %v808
        %v829 = vmul.f32 %v826, %v808
        %v830 = vadd.f32 %v827, 1e-05
        %v831 = vadd.f32 %v828, 1e-05
        %v832 = vadd.f32 %v829, 1e-05
        %v833 = vrsqrt.pop %v830
        %v834 = vrsqrt.pop %v831
        %v835 = vrsqrt.pop %v832
        %v836 = vmul.f32 %v812, %v833
        %v837 = vmul.f32 %v813, %v834
        %v838 = vmul.f32 %v814, %v835
        %v840 = vlaneseq
        %v841 = vshrl.u32 %v840, 7
        %v842 = vsub.s32 0, %v841
        %v843 = vrot.slane %v766, %v842
        %v845 = vmul.f32 %v836, %v843
        %v846 = vmul.f32 %v837, %v843
        %v847 = vmul.f32 %v838, %v843
        %v849 = vlaneseq
        %v850 = vshrl.u32 %v849, 7
        %v851 = vsub.s32 0, %v850
        %v852 = vrot.slane %v767, %v851
        %v854 = vadd.f32 %v845, %v852
        %v855 = vadd.f32 %v846, %v852
        %v856 = vadd.f32 %v847, %v852
        %v857 = vpack.c.bf16 %v855, %v854
        %v858 = vpack.c.bf16 %v856, %v856
        %v860 = vlaneseq
        %v861 = vshrl.u32 %v860, 7
        %v862 = vsub.s32 0, %v861
        %v863 = vrot.slane %v772, %v862
        %v869 = vunpack.c.l.b16 %v768
        %v870 = vunpack.c.l.b16 %v769
        %v871 = vunpack.c.l.b16 %v770
        %v872 = vunpack.c.l.b16 %v771
        %v873 = vpack.c.b16 %v870, %v869
        %v874 = vpack.c.b16 %v872, %v871
        %v878 = vsel %vm797, %v857, 0
        %v881 = vsel %vm797, %v858, 0
        %883 = vmatprep.subr.bf16.mxu0 0
        %884 = vmatpush1.bf16.msra.mxu0 0
        %885 = vmatprep.subr.bf16.mxu0 0
        %886 = vmatpush1.bf16.msra.mxu0 0
        %887 = vmatprep.subr.bf16.mxu0 0
        %888 = vmatpush1.bf16.msra.mxu0 0
        %889 = vmatprep.subr.bf16.mxu0 0
        %890 = vmatpush1.bf16.msra.mxu0 0
        %891 = vmatprep.subr.bf16.mxu0 0
        %892 = vmatpush1.bf16.msra.mxu0 0
        %893 = vmatprep.subr.bf16.mxu0 0
        %894 = vmatpush1.bf16.msra.mxu0 0
        %895 = vmatprep.subr.bf16.mxu0 0
        %896 = vmatpush1.bf16.msra.mxu0 %v874
        %897 = vmatprep.subr.bf16.mxu0 0
        %898 = vmatpush1.bf16.msra.mxu0 %v873
        %899 = vmatprep.subr.bf16.mxu0 0
        %900 = vmatpush2.bf16.msra.mxu0 0
        %901 = vmatprep.subr.bf16.mxu0 0
        %902 = vmatpush2.bf16.msra.mxu0 0
        %903 = vmatprep.subr.bf16.mxu0 0
        %904 = vmatpush2.bf16.msra.mxu0 0
        %905 = vmatprep.subr.bf16.mxu0 0
        %906 = vmatpush2.bf16.msra.mxu0 0
        %907 = vmatprep.subr.bf16.mxu0 0
        %908 = vmatpush2.bf16.msra.mxu0 0
        %909 = vmatprep.subr.bf16.mxu0 0
        %910 = vmatpush2.bf16.msra.mxu0 0
        %911 = vmatprep.subr.bf16.mxu0 0
        %912 = vmatpush2.bf16.msra.mxu0 0
        %913 = vmatprep.subr.bf16.mxu0 0
        %914 = vmatpush2.bf16.msra.mxu0 0
        %915 = vmatprep.mubr.bf16.mxu0 0
        %916 = vmatmul.mubr.bf16.gmra.mxu0 %v878
        %v917 = vpop.f32.mrf.mxu0
        %v918 = vadd.f32 %v863, %v917
        %v919 = vpop.f32.mrf.mxu0
        %v920 = vpop.f32.mrf.mxu0
        %v921 = vadd.f32 %v863, %v920
        %v922 = vpop.f32.mrf.mxu0
        %923 = vmatprep.mubr.bf16.mxu0 0
        %924 = vmatmul.mubr.bf16.gmra.mxu0 %v881
        %v925 = vpop.f32.mrf.mxu0
        %v926 = vadd.f32 %v863, %v925
        %v927 = vpop.f32.mrf.mxu0
        %v928 = vpop.f32.mrf.mxu0
        %v929 = vpop.f32.mrf.mxu0
        %930 = vdwg.mxu0
        %v931 = vpack.c.bf16 %v921, %v918
        %v932 = vpack.c.bf16 %v926, %v926
        %v935 = vunpack.c.l.b16 %v931
        %v936 = vunpack.c.h.b16 %v931
        %v937 = vunpack.c.l.b16 %v932
        %v938 = vpack.c.b16 %v935, %v935
        %v939 = vpack.c.b16 %v936, %v936
        %v940 = vpack.c.b16 %v937, %v937
        %vm944 = vcmask 781312
        %945 = vst.msk [vmem:[#allocation3] sm:$0xf] %vm944, %v938
        %946 = vst.msk [vmem:[#allocation3 + $0x4] sm:$0xf] %vm944, %v939
        %vm947 = vcmask 778240
        %948 = vst.msk [vmem:[#allocation3 + $0x8] sm:$0x1] %vm947, %v940
        %v949 = vld [vmem:[#allocation3] sm:$0xf]
        %v950 = vld [vmem:[#allocation3 + $0x4] sm:$0xf]
        %v951 = vld [vmem:[#allocation3 + $0x8] sm:$0x1]
        %v955 = vunpack.c.l.b16 %v949
        %v956 = vunpack.c.l.b16 %v950
        %v957 = vunpack.c.l.b16 %v951
        %v958 = vpack.c.b16 %v956, %v955
        %v959 = vpack.c.b16 %v957, %v957
        %960 = vrot.lane.b32.xlu0 %v958, 96
        %v961 = vpop.permute.xlu0 %960
        %962 = vrot.lane.b32.xlu0 %v959, 96
        %v963 = vpop.permute.xlu0 %962
        %vm964 = vcmask 130048
        %v966 = vsel %vm964, %v958, 0
        %v969 = vsel %vm964, %v959, 0
        %v972 = vsel %vm964, %v961, 0
        %v975 = vsel %vm964, %v963, 0
        %977 = vmatprep.subr.bf16.mxu0 0
        %978 = vmatpush1.bf16.xpose.msra.mxu0 0
        %979 = vmatprep.subr.bf16.mxu0 0
        %980 = vmatpush1.bf16.xpose.msra.mxu0 0
        %981 = vmatprep.subr.bf16.mxu0 0
        %982 = vmatpush1.bf16.xpose.msra.mxu0 0
        %983 = vmatprep.subr.bf16.mxu0 0
        %984 = vmatpush1.bf16.xpose.msra.mxu0 0
        %985 = vmatprep.subr.bf16.mxu0 0
        %986 = vmatpush1.bf16.xpose.msra.mxu0 0
        %987 = vmatprep.subr.bf16.mxu0 0
        %988 = vmatpush1.bf16.xpose.msra.mxu0 0
        %989 = vmatprep.subr.bf16.mxu0 0
        %990 = vmatpush1.bf16.xpose.msra.mxu0 %v975
        %991 = vmatprep.subr.bf16.mxu0 0
        %992 = vmatpush1.bf16.xpose.msra.mxu0 %v972
        %993 = vmatprep.subr.bf16.mxu0 0
        %994 = vmatpush2.bf16.xpose.msra.mxu0 0
        %995 = vmatprep.subr.bf16.mxu0 0
        %996 = vmatpush2.bf16.xpose.msra.mxu0 0
        %997 = vmatprep.subr.bf16.mxu0 0
        %998 = vmatpush2.bf16.xpose.msra.mxu0 0
        %999 = vmatprep.subr.bf16.mxu0 0
        %1000 = vmatpush2.bf16.xpose.msra.mxu0 0
        %1001 = vmatprep.subr.bf16.mxu0 0
        %1002 = vmatpush2.bf16.xpose.msra.mxu0 0
        %1003 = vmatprep.subr.bf16.mxu0 0
        %1004 = vmatpush2.bf16.xpose.msra.mxu0 0
        %1005 = vmatprep.subr.bf16.mxu0 0
        %1006 = vmatpush2.bf16.xpose.msra.mxu0 0
        %1007 = vmatprep.subr.bf16.mxu0 0
        %1008 = vmatpush2.bf16.xpose.msra.mxu0 0
        %1009 = vmatprep.mubr.bf16.mxu0 0
        %1010 = vmatmul.mubr.bf16.gmra.mxu0 %v966
        %v1011 = vpop.f32.mrf.mxu0
        %v1012 = vadd.f32 0.0, %v1011
        %v1013 = vpop.f32.mrf.mxu0
        %v1014 = vpop.f32.mrf.mxu0
        %v1015 = vadd.f32 0.0, %v1014
        %v1016 = vpop.f32.mrf.mxu0
        %1017 = vmatprep.mubr.bf16.mxu0 0
        %1018 = vmatmul.mubr.bf16.gmra.mxu0 %v969
        %v1019 = vpop.f32.mrf.mxu0
        %v1020 = vadd.f32 0.0, %v1019
        %v1021 = vpop.f32.mrf.mxu0
        %v1022 = vpop.f32.mrf.mxu0
        %v1023 = vpop.f32.mrf.mxu0
        %1024 = vdwg.mxu0
        %vm1025 = vcmask 146432
        %v1026 = vsel %vm1025, %v1012, -inf
        %1027 = vmax.xlane.f32.xlu0 %v1026
        %v1028 = vpop.xlane.xlu0 %1027
        %v1029 = vsel %vm1025, %v1015, -inf
        %1030 = vmax.xlane.f32.xlu0 %v1029
        %v1031 = vpop.xlane.xlu0 %1030
        %vm1032 = vcmask 140288
        %v1033 = vsel %vm1032, %v1020, -inf
        %1034 = vmax.xlane.f32.xlu0 %v1033
        %v1035 = vpop.xlane.xlu0 %1034
        %v1036 = vsub.f32 %v1012, %v1028
        %v1037 = vsub.f32 %v1015, %v1031
        %v1038 = vsub.f32 %v1020, %v1035
        %v1039 = vmul.f32 %v1036, 1.442695
        %v1040 = vpow.pop %v1039
        %v1041 = vmul.f32 %v1037, 1.442695
        %v1042 = vpow.pop %v1041
        %v1043 = vmul.f32 %v1038, 1.442695
        %v1044 = vpow.pop %v1043
        %v1045 = vsel %vm1025, %v1040, 0.0
        %1046 = vadd.xlane.f32.xlu0 %v1045
        %v1047 = vpop.xlane.xlu0 %1046
        %v1048 = vsel %vm1025, %v1042, 0.0
        %1049 = vadd.xlane.f32.xlu0 %v1048
        %v1050 = vpop.xlane.xlu0 %1049
        %v1051 = vsel %vm1032, %v1044, 0.0
        %1052 = vadd.xlane.f32.xlu0 %v1051
        %v1053 = vpop.xlane.xlu0 %1052
        %v1054 = vrcp.pop %v1047
        %v1055 = vrcp.pop %v1050
        %v1056 = vrcp.pop %v1053
        %v1057 = vmul.f32 %v1040, %v1054
        %v1058 = vmul.f32 %v1042, %v1055
        %v1059 = vmul.f32 %v1044, %v1056
        %v1060 = vpack.c.bf16 %v1058, %v1057
        %v1061 = vpack.c.bf16 %v1059, %v1059
        %1062 = vrot.lane.b32.xlu0 %v958, 64
        %v1063 = vpop.permute.xlu0 %1062
        %1064 = vrot.lane.b32.xlu0 %v959, 64
        %v1065 = vpop.permute.xlu0 %1064
        %v1068 = vsel %vm1025, %v1060, 0
        %v1071 = vsel %vm1025, %v1061, 0
        %vm1073 = vcmask 1040384
        %v1075 = vsel %vm1073, %v1065, 0
        %1077 = vmatprep.subr.bf16.mxu0 0
        %1078 = vmatpush1.bf16.msra.mxu0 0
        %1079 = vmatprep.subr.bf16.mxu0 0
        %1080 = vmatpush1.bf16.msra.mxu0 0
        %1081 = vmatprep.subr.bf16.mxu0 0
        %1082 = vmatpush1.bf16.msra.mxu0 0
        %1083 = vmatprep.subr.bf16.mxu0 0
        %1084 = vmatpush1.bf16.msra.mxu0 0
        %1085 = vmatprep.subr.bf16.mxu0 0
        %1086 = vmatpush1.bf16.msra.mxu0 0
        %1087 = vmatprep.subr.bf16.mxu0 0
        %1088 = vmatpush1.bf16.msra.mxu0 0
        %1089 = vmatprep.subr.bf16.mxu0 0
        %1090 = vmatpush1.bf16.msra.mxu0 %v1075
        %1091 = vmatprep.subr.bf16.mxu0 0
        %1092 = vmatpush1.bf16.msra.mxu0 %v1063
        %1093 = vmatprep.subr.bf16.mxu0 0
        %1094 = vmatpush2.bf16.msra.mxu0 0
        %1095 = vmatprep.subr.bf16.mxu0 0
        %1096 = vmatpush2.bf16.msra.mxu0 0
        %1097 = vmatprep.subr.bf16.mxu0 0
        %1098 = vmatpush2.bf16.msra.mxu0 0
        %1099 = vmatprep.subr.bf16.mxu0 0
        %1100 = vmatpush2.bf16.msra.mxu0 0
        %1101 = vmatprep.subr.bf16.mxu0 0
        %1102 = vmatpush2.bf16.msra.mxu0 0
        %1103 = vmatprep.subr.bf16.mxu0 0
        %1104 = vmatpush2.bf16.msra.mxu0 0
        %1105 = vmatprep.subr.bf16.mxu0 0
        %1106 = vmatpush2.bf16.msra.mxu0 0
        %1107 = vmatprep.subr.bf16.mxu0 0
        %1108 = vmatpush2.bf16.msra.mxu0 0
        %1109 = vmatprep.mubr.bf16.mxu0 0
        %1110 = vmatmul.mubr.bf16.gmra.mxu0 %v1068
        %v1111 = vpop.f32.mrf.mxu0
        %v1112 = vadd.f32 0.0, %v1111
        %v1113 = vpop.f32.mrf.mxu0
        %v1114 = vpop.f32.mrf.mxu0
        %v1115 = vadd.f32 0.0, %v1114
        %v1116 = vpop.f32.mrf.mxu0
        %1117 = vmatprep.mubr.bf16.mxu0 0
        %1118 = vmatmul.mubr.bf16.gmra.mxu0 %v1071
        %v1119 = vpop.f32.mrf.mxu0
        %v1120 = vadd.f32 0.0, %v1119
        %v1121 = vpop.f32.mrf.mxu0
        %v1122 = vpop.f32.mrf.mxu0
        %v1123 = vpop.f32.mrf.mxu0
        %1124 = vdwg.mxu0
        %1125 = vrot.lane.b32.xlu0 %v958, 112
        %v1126 = vpop.permute.xlu0 %1125
        %1127 = vrot.lane.b32.xlu0 %v959, 112
        %v1128 = vpop.permute.xlu0 %1127
        %1129 = vrot.lane.b32.xlu0 %v958, 80
        %v1130 = vpop.permute.xlu0 %1129
        %1131 = vrot.lane.b32.xlu0 %v959, 80
        %v1132 = vpop.permute.xlu0 %1131
        %v1134 = vsel %vm964, %v1126, 0
        %v1137 = vsel %vm964, %v1128, 0
        %v1140 = vsel %vm964, %v1130, 0
        %v1143 = vsel %vm964, %v1132, 0
        %1145 = vmatprep.subr.bf16.mxu0 0
        %1146 = vmatpush1.bf16.xpose.msra.mxu0 0
        %1147 = vmatprep.subr.bf16.mxu0 0
        %1148 = vmatpush1.bf16.xpose.msra.mxu0 0
        %1149 = vmatprep.subr.bf16.mxu0 0
        %1150 = vmatpush1.bf16.xpose.msra.mxu0 0
        %1151 = vmatprep.subr.bf16.mxu0 0
        %1152 = vmatpush1.bf16.xpose.msra.mxu0 0
        %1153 = vmatprep.subr.bf16.mxu0 0
        %1154 = vmatpush1.bf16.xpose.msra.mxu0 0
        %1155 = vmatprep.subr.bf16.mxu0 0
        %1156 = vmatpush1.bf16.xpose.msra.mxu0 0
        %1157 = vmatprep.subr.bf16.mxu0 0
        %1158 = vmatpush1.bf16.xpose.msra.mxu0 %v1143
        %1159 = vmatprep.subr.bf16.mxu0 0
        %1160 = vmatpush1.bf16.xpose.msra.mxu0 %v1140
        %1161 = vmatprep.subr.bf16.mxu0 0
        %1162 = vmatpush2.bf16.xpose.msra.mxu0 0
        %1163 = vmatprep.subr.bf16.mxu0 0
        %1164 = vmatpush2.bf16.xpose.msra.mxu0 0
        %1165 = vmatprep.subr.bf16.mxu0 0
        %1166 = vmatpush2.bf16.xpose.msra.mxu0 0
        %1167 = vmatprep.subr.bf16.mxu0 0
        %1168 = vmatpush2.bf16.xpose.msra.mxu0 0
        %1169 = vmatprep.subr.bf16.mxu0 0
        %1170 = vmatpush2.bf16.xpose.msra.mxu0 0
        %1171 = vmatprep.subr.bf16.mxu0 0
        %1172 = vmatpush2.bf16.xpose.msra.mxu0 0
        %1173 = vmatprep.subr.bf16.mxu0 0
        %1174 = vmatpush2.bf16.xpose.msra.mxu0 0
        %1175 = vmatprep.subr.bf16.mxu0 0
        %1176 = vmatpush2.bf16.xpose.msra.mxu0 0
        %1177 = vmatprep.mubr.bf16.mxu0 0
        %1178 = vmatmul.mubr.bf16.gmra.mxu0 %v1134
        %v1179 = vpop.f32.mrf.mxu0
        %v1180 = vadd.f32 0.0, %v1179
        %v1181 = vpop.f32.mrf.mxu0
        %v1182 = vpop.f32.mrf.mxu0
        %v1183 = vadd.f32 0.0, %v1182
        %v1184 = vpop.f32.mrf.mxu0
        %1185 = vmatprep.mubr.bf16.mxu0 0
        %1186 = vmatmul.mubr.bf16.gmra.mxu0 %v1137
        %v1187 = vpop.f32.mrf.mxu0
        %v1188 = vadd.f32 0.0, %v1187
        %v1189 = vpop.f32.mrf.mxu0
        %v1190 = vpop.f32.mrf.mxu0
        %v1191 = vpop.f32.mrf.mxu0
        %1192 = vdwg.mxu0
        %v1193 = vsel %vm1025, %v1180, -inf
        %1194 = vmax.xlane.f32.xlu0 %v1193
        %v1195 = vpop.xlane.xlu0 %1194
        %v1196 = vsel %vm1025, %v1183, -inf
        %1197 = vmax.xlane.f32.xlu0 %v1196
        %v1198 = vpop.xlane.xlu0 %1197
        %v1199 = vsel %vm1032, %v1188, -inf
        %1200 = vmax.xlane.f32.xlu0 %v1199
        %v1201 = vpop.xlane.xlu0 %1200
        %v1202 = vsub.f32 %v1180, %v1195
        %v1203 = vsub.f32 %v1183, %v1198
        %v1204 = vsub.f32 %v1188, %v1201
        %v1205 = vmul.f32 %v1202, 1.442695
        %v1206 = vpow.pop %v1205
        %v1207 = vmul.f32 %v1203, 1.442695
        %v1208 = vpow.pop %v1207
        %v1209 = vmul.f32 %v1204, 1.442695
        %v1210 = vpow.pop %v1209
        %v1211 = vsel %vm1025, %v1206, 0.0
        %1212 = vadd.xlane.f32.xlu0 %v1211
        %v1213 = vpop.xlane.xlu0 %1212
        %v1214 = vsel %vm1025, %v1208, 0.0
        %1215 = vadd.xlane.f32.xlu0 %v1214
        %v1216 = vpop.xlane.xlu0 %1215
        %v1217 = vsel %vm1032, %v1210, 0.0
        %1218 = vadd.xlane.f32.xlu0 %v1217
        %v1219 = vpop.xlane.xlu0 %1218
        %v1220 = vrcp.pop %v1213
        %v1221 = vrcp.pop %v1216
        %v1222 = vrcp.pop %v1219
        %v1223 = vmul.f32 %v1206, %v1220
        %v1224 = vmul.f32 %v1208, %v1221
        %v1225 = vmul.f32 %v1210, %v1222
        %v1226 = vpack.c.bf16 %v1224, %v1223
        %v1227 = vpack.c.bf16 %v1225, %v1225
        %1228 = vrot.lane.b32.xlu0 %v958, 48
        %v1229 = vpop.permute.xlu0 %1228
        %1230 = vrot.lane.b32.xlu0 %v959, 48
        %v1231 = vpop.permute.xlu0 %1230
        %v1234 = vsel %vm1025, %v1226, 0
        %v1237 = vsel %vm1025, %v1227, 0
        %v1240 = vsel %vm1073, %v1231, 0
        %1242 = vmatprep.subr.bf16.mxu0 0
        %1243 = vmatpush1.bf16.msra.mxu0 0
        %1244 = vmatprep.subr.bf16.mxu0 0
        %1245 = vmatpush1.bf16.msra.mxu0 0
        %1246 = vmatprep.subr.bf16.mxu0 0
        %1247 = vmatpush1.bf16.msra.mxu0 0
        %1248 = vmatprep.subr.bf16.mxu0 0
        %1249 = vmatpush1.bf16.msra.mxu0 0
        %1250 = vmatprep.subr.bf16.mxu0 0
        %1251 = vmatpush1.bf16.msra.mxu0 0
        %1252 = vmatprep.subr.bf16.mxu0 0
        %1253 = vmatpush1.bf16.msra.mxu0 0
        %1254 = vmatprep.subr.bf16.mxu0 0
        %1255 = vmatpush1.bf16.msra.mxu0 %v1240
        %1256 = vmatprep.subr.bf16.mxu0 0
        %1257 = vmatpush1.bf16.msra.mxu0 %v1229
        %1258 = vmatprep.subr.bf16.mxu0 0
        %1259 = vmatpush2.bf16.msra.mxu0 0
        %1260 = vmatprep.subr.bf16.mxu0 0
        %1261 = vmatpush2.bf16.msra.mxu0 0
        %1262 = vmatprep.subr.bf16.mxu0 0
        %1263 = vmatpush2.bf16.msra.mxu0 0
        %1264 = vmatprep.subr.bf16.mxu0 0
        %1265 = vmatpush2.bf16.msra.mxu0 0
        %1266 = vmatprep.subr.bf16.mxu0 0
        %1267 = vmatpush2.bf16.msra.mxu0 0
        %1268 = vmatprep.subr.bf16.mxu0 0
        %1269 = vmatpush2.bf16.msra.mxu0 0
        %1270 = vmatprep.subr.bf16.mxu0 0
        %1271 = vmatpush2.bf16.msra.mxu0 0
        %1272 = vmatprep.subr.bf16.mxu0 0
        %1273 = vmatpush2.bf16.msra.mxu0 0
        %1274 = vmatprep.mubr.bf16.mxu0 0
        %1275 = vmatmul.mubr.bf16.gmra.mxu0 %v1234
        %v1276 = vpop.f32.mrf.mxu0
        %v1277 = vadd.f32 0.0, %v1276
        %v1278 = vpop.f32.mrf.mxu0
        %v1279 = vpop.f32.mrf.mxu0
        %v1280 = vadd.f32 0.0, %v1279
        %v1281 = vpop.f32.mrf.mxu0
        %1282 = vmatprep.mubr.bf16.mxu0 0
        %1283 = vmatmul.mubr.bf16.gmra.mxu0 %v1237
        %v1284 = vpop.f32.mrf.mxu0
        %v1285 = vadd.f32 0.0, %v1284
        %v1286 = vpop.f32.mrf.mxu0
        %v1287 = vpop.f32.mrf.mxu0
        %v1288 = vpop.f32.mrf.mxu0
        %1289 = vdwg.mxu0
        %1293 = vrot.lane.b32.xlu0 %v1277, 16
        %v1294 = vpop.permute.xlu0 %1293
        %1295 = vrot.lane.b32.xlu0 %v1280, 16
        %v1296 = vpop.permute.xlu0 %1295
        %1297 = vrot.lane.b32.xlu0 %v1285, 16
        %v1298 = vpop.permute.xlu0 %1297
        %v1302 = vsel %vm964, %v1112, %v1294
        %v1303 = vsel %vm964, %v1115, %v1296
        %v1304 = vsel %vm964, %v1120, %v1298
        %v1305 = vpack.c.bf16 %v1303, %v1302
        %v1306 = vpack.c.bf16 %v1304, %v1304
        %v1309 = vunpack.c.l.b16 %v1305
        %v1310 = vunpack.c.h.b16 %v1305
        %v1311 = vunpack.c.l.b16 %v1306
        %v1312 = vpack.c.b16 %v1309, %v1309
        %v1313 = vpack.c.b16 %v1310, %v1310
        %v1314 = vpack.c.b16 %v1311, %v1311
        %vm1318 = vcmask 257024
        %1319 = vst.msk [vmem:[#allocation4] sm:$0xf] %vm1318, %v1312
        %1320 = vst.msk [vmem:[#allocation4 + $0x4] sm:$0xf] %vm1318, %v1313
        %vm1321 = vcmask 253952
        %1322 = vst.msk [vmem:[#allocation4 + $0x8] sm:$0x1] %vm1321, %v1314
        %v1323 = vld [vmem:[#allocation4] sm:$0xf]
        %v1324 = vld [vmem:[#allocation4 + $0x4] sm:$0xf]
        %v1325 = vld [vmem:[#allocation4 + $0x8] sm:$0x1]
        %v1327 = vlaneseq
        %v1328 = vshrl.u32 %v1327, 7
        %v1329 = vsub.s32 0, %v1328
        %v1330 = vrot.slane %v777, %v1329
        %v1335 = vunpack.c.l.b16 %v1323
        %v1336 = vunpack.c.l.b16 %v1324
        %v1337 = vunpack.c.l.b16 %v1325
        %v1338 = vpack.c.b16 %v1336, %v1335
        %v1339 = vpack.c.b16 %v1337, %v1337
        %v1344 = vunpack.c.l.b16 %v773
        %v1345 = vunpack.c.l.b16 %v774
        %v1346 = vunpack.c.l.b16 %v775
        %v1347 = vunpack.c.l.b16 %v776
        %v1348 = vpack.c.b16 %v1345, %v1344
        %v1349 = vpack.c.b16 %v1347, %v1346
        %v1353 = vsel %vm797, %v1338, 0
        %v1356 = vsel %vm797, %v1339, 0
        %1358 = vmatprep.subr.bf16.mxu0 0
        %1359 = vmatpush1.bf16.msra.mxu0 0
        %1360 = vmatprep.subr.bf16.mxu0 0
        %1361 = vmatpush1.bf16.msra.mxu0 0
        %1362 = vmatprep.subr.bf16.mxu0 0
        %1363 = vmatpush1.bf16.msra.mxu0 0
        %1364 = vmatprep.subr.bf16.mxu0 0
        %1365 = vmatpush1.bf16.msra.mxu0 0
        %1366 = vmatprep.subr.bf16.mxu0 0
        %1367 = vmatpush1.bf16.msra.mxu0 0
        %1368 = vmatprep.subr.bf16.mxu0 0
        %1369 = vmatpush1.bf16.msra.mxu0 0
        %1370 = vmatprep.subr.bf16.mxu0 0
        %1371 = vmatpush1.bf16.msra.mxu0 %v1349
        %1372 = vmatprep.subr.bf16.mxu0 0
        %1373 = vmatpush1.bf16.msra.mxu0 %v1348
        %1374 = vmatprep.subr.bf16.mxu0 0
        %1375 = vmatpush2.bf16.msra.mxu0 0
        %1376 = vmatprep.subr.bf16.mxu0 0
        %1377 = vmatpush2.bf16.msra.mxu0 0
        %1378 = vmatprep.subr.bf16.mxu0 0
        %1379 = vmatpush2.bf16.msra.mxu0 0
        %1380 = vmatprep.subr.bf16.mxu0 0
        %1381 = vmatpush2.bf16.msra.mxu0 0
        %1382 = vmatprep.subr.bf16.mxu0 0
        %1383 = vmatpush2.bf16.msra.mxu0 0
        %1384 = vmatprep.subr.bf16.mxu0 0
        %1385 = vmatpush2.bf16.msra.mxu0 0
        %1386 = vmatprep.subr.bf16.mxu0 0
        %1387 = vmatpush2.bf16.msra.mxu0 0
        %1388 = vmatprep.subr.bf16.mxu0 0
        %1389 = vmatpush2.bf16.msra.mxu0 0
        %1390 = vmatprep.mubr.bf16.mxu0 0
        %1391 = vmatmul.mubr.bf16.gmra.mxu0 %v1353
        %v1392 = vpop.f32.mrf.mxu0
        %v1393 = vadd.f32 %v1330, %v1392
        %v1394 = vpop.f32.mrf.mxu0
        %v1395 = vpop.f32.mrf.mxu0
        %v1396 = vadd.f32 %v1330, %v1395
        %v1397 = vpop.f32.mrf.mxu0
        %1398 = vmatprep.mubr.bf16.mxu0 0
        %1399 = vmatmul.mubr.bf16.gmra.mxu0 %v1356
        %v1400 = vpop.f32.mrf.mxu0
        %v1401 = vadd.f32 %v1330, %v1400
        %v1402 = vpop.f32.mrf.mxu0
        %v1403 = vpop.f32.mrf.mxu0
        %v1404 = vpop.f32.mrf.mxu0
        %1405 = vdwg.mxu0
        %v1406 = vadd.f32 %v794, %v1393
        %v1407 = vadd.f32 %v795, %v1396
        %v1408 = vadd.f32 %v796, %v1401
        %v1409 = vsel %vm797, %v1406, 0.0
        %1410 = vadd.xlane.f32.xlu0 %v1409
        %v1411 = vpop.xlane.xlu0 %1410
        %v1412 = vsel %vm797, %v1407, 0.0
        %1413 = vadd.xlane.f32.xlu0 %v1412
        %v1414 = vpop.xlane.xlu0 %1413
        %v1415 = vsel %vm804, %v1408, 0.0
        %1416 = vadd.xlane.f32.xlu0 %v1415
        %v1417 = vpop.xlane.xlu0 %1416
        %v1418 = vmul.f32 %v1411, %v808
        %v1419 = vmul.f32 %v1414, %v808
        %v1420 = vmul.f32 %v1417, %v808
        %v1421 = vsub.f32 %v1406, %v1418
        %v1422 = vsub.f32 %v1407, %v1419
        %v1423 = vsub.f32 %v1408, %v1420
        %v1424 = vmul.f32 %v1421, %v1421
        %v1425 = vmul.f32 %v1422, %v1422
        %v1426 = vmul.f32 %v1423, %v1423
        %v1427 = vsel %vm797, %v1424, 0.0
        %1428 = vadd.xlane.f32.xlu0 %v1427
        %v1429 = vpop.xlane.xlu0 %1428
        %v1430 = vsel %vm797, %v1425, 0.0
        %1431 = vadd.xlane.f32.xlu0 %v1430
        %v1432 = vpop.xlane.xlu0 %1431
        %v1433 = vsel %vm804, %v1426, 0.0
        %1434 = vadd.xlane.f32.xlu0 %v1433
        %v1435 = vpop.xlane.xlu0 %1434
        %v1436 = vmul.f32 %v1429, %v808
        %v1437 = vmul.f32 %v1432, %v808
        %v1438 = vmul.f32 %v1435, %v808
        %v1439 = vadd.f32 %v1436, 1e-05
        %v1440 = vadd.f32 %v1437, 1e-05
        %v1441 = vadd.f32 %v1438, 1e-05
        %v1442 = vrsqrt.pop %v1439
        %v1443 = vrsqrt.pop %v1440
        %v1444 = vrsqrt.pop %v1441
        %v1445 = vmul.f32 %v1421, %v1442
        %v1446 = vmul.f32 %v1422, %v1443
        %v1447 = vmul.f32 %v1423, %v1444
        %v1449 = vlaneseq
        %v1450 = vshrl.u32 %v1449, 7
        %v1451 = vsub.s32 0, %v1450
        %v1452 = vrot.slane %v778, %v1451
        %v1454 = vmul.f32 %v1445, %v1452
        %v1455 = vmul.f32 %v1446, %v1452
        %v1456 = vmul.f32 %v1447, %v1452
        %v1458 = vlaneseq
        %v1459 = vshrl.u32 %v1458, 7
        %v1460 = vsub.s32 0, %v1459
        %v1461 = vrot.slane %v779, %v1460
        %v1463 = vadd.f32 %v1454, %v1461
        %v1464 = vadd.f32 %v1455, %v1461
        %v1465 = vadd.f32 %v1456, %v1461
        %v1466 = vpack.c.bf16 %v1464, %v1463
        %v1467 = vpack.c.bf16 %v1465, %v1465
        %v1469 = vlaneseq
        %v1470 = vshrl.u32 %v1469, 7
        %v1471 = vsub.s32 0, %v1470
        %v1472 = vrot.slane %v784, %v1471
        %v1478 = vunpack.c.l.b16 %v780
        %v1479 = vunpack.c.l.b16 %v781
        %v1480 = vunpack.c.l.b16 %v782
        %v1481 = vunpack.c.l.b16 %v783
        %v1482 = vpack.c.b16 %v1479, %v1478
        %v1483 = vpack.c.b16 %v1481, %v1480
        %v1487 = vsel %vm797, %v1466, 0
        %v1490 = vsel %vm797, %v1467, 0
        %1492 = vmatprep.subr.bf16.mxu0 0
        %1493 = vmatpush1.bf16.msra.mxu0 0
        %1494 = vmatprep.subr.bf16.mxu0 0
        %1495 = vmatpush1.bf16.msra.mxu0 0
        %1496 = vmatprep.subr.bf16.mxu0 0
        %1497 = vmatpush1.bf16.msra.mxu0 0
        %1498 = vmatprep.subr.bf16.mxu0 0
        %1499 = vmatpush1.bf16.msra.mxu0 0
        %1500 = vmatprep.subr.bf16.mxu0 0
        %1501 = vmatpush1.bf16.msra.mxu0 0
        %1502 = vmatprep.subr.bf16.mxu0 0
        %1503 = vmatpush1.bf16.msra.mxu0 0
        %1504 = vmatprep.subr.bf16.mxu0 0
        %1505 = vmatpush1.bf16.msra.mxu0 %v1483
        %1506 = vmatprep.subr.bf16.mxu0 0
        %1507 = vmatpush1.bf16.msra.mxu0 %v1482
        %1508 = vmatprep.subr.bf16.mxu0 0
        %1509 = vmatpush2.bf16.msra.mxu0 0
        %1510 = vmatprep.subr.bf16.mxu0 0
        %1511 = vmatpush2.bf16.msra.mxu0 0
        %1512 = vmatprep.subr.bf16.mxu0 0
        %1513 = vmatpush2.bf16.msra.mxu0 0
        %1514 = vmatprep.subr.bf16.mxu0 0
        %1515 = vmatpush2.bf16.msra.mxu0 0
        %1516 = vmatprep.subr.bf16.mxu0 0
        %1517 = vmatpush2.bf16.msra.mxu0 0
        %1518 = vmatprep.subr.bf16.mxu0 0
        %1519 = vmatpush2.bf16.msra.mxu0 0
        %1520 = vmatprep.subr.bf16.mxu0 0
        %1521 = vmatpush2.bf16.msra.mxu0 0
        %1522 = vmatprep.subr.bf16.mxu0 0
        %1523 = vmatpush2.bf16.msra.mxu0 0
        %1524 = vmatprep.mubr.bf16.mxu0 0
        %1525 = vmatmul.mubr.bf16.gmra.mxu0 %v1487
        %v1526 = vpop.f32.mrf.mxu0
        %v1527 = vadd.f32 %v1472, %v1526
        %v1528 = vpop.f32.mrf.mxu0
        %v1529 = vpop.f32.mrf.mxu0
        %v1530 = vadd.f32 %v1472, %v1529
        %v1531 = vpop.f32.mrf.mxu0
        %1532 = vmatprep.mubr.bf16.mxu0 0
        %1533 = vmatmul.mubr.bf16.gmra.mxu0 %v1490
        %v1534 = vpop.f32.mrf.mxu0
        %v1535 = vadd.f32 %v1472, %v1534
        %v1536 = vpop.f32.mrf.mxu0
        %v1537 = vpop.f32.mrf.mxu0
        %v1538 = vpop.f32.mrf.mxu0
        %1539 = vdwg.mxu0
        %v1540 = vmul.f32 %v1527, %v1527
        %v1541 = vmul.f32 %v1530, %v1530
        %v1542 = vmul.f32 %v1535, %v1535
        %v1543 = vmul.f32 %v1527, %v1540
        %v1544 = vmul.f32 %v1530, %v1541
        %v1545 = vmul.f32 %v1535, %v1542
        %v1546 = vmul.f32 %v1543, 0.044715
        %v1547 = vmul.f32 %v1544, 0.044715
        %v1548 = vmul.f32 %v1545, 0.044715
        %v1549 = vadd.f32 %v1527, %v1546
        %v1550 = vadd.f32 %v1530, %v1547
        %v1551 = vadd.f32 %v1535, %v1548
        %v1552 = vmul.f32 %v1549, 0.7978846
        %v1553 = vmul.f32 %v1550, 0.7978846
        %v1554 = vmul.f32 %v1551, 0.7978846
        %v1555 = vtanh.pop %v1552
        %v1556 = vtanh.pop %v1553
        %v1557 = vtanh.pop %v1554
        %v1558 = vadd.f32 %v1555, 1.0
        %v1559 = vadd.f32 %v1556, 1.0
        %v1560 = vadd.f32 %v1557, 1.0
        %v1561 = vmul.f32 %v1558, 0.5
        %v1562 = vmul.f32 %v1559, 0.5
        %v1563 = vmul.f32 %v1560, 0.5
        %v1564 = vmul.f32 %v1527, %v1561
        %v1565 = vmul.f32 %v1530, %v1562
        %v1566 = vmul.f32 %v1535, %v1563
        %v1567 = vpack.c.bf16 %v1565, %v1564
        %v1568 = vpack.c.bf16 %v1566, %v1566
        %v1570 = vlaneseq
        %v1571 = vshrl.u32 %v1570, 7
        %v1572 = vsub.s32 0, %v1571
        %v1573 = vrot.slane %v793, %v1572
        %v1583 = vunpack.c.l.b16 %v785
        %v1584 = vunpack.c.l.b16 %v786
        %v1585 = vunpack.c.l.b16 %v787
        %v1586 = vunpack.c.l.b16 %v788
        %v1587 = vunpack.c.l.b16 %v789
        %v1588 = vunpack.c.l.b16 %v790
        %v1589 = vunpack.c.l.b16 %v791
        %v1590 = vunpack.c.l.b16 %v792
        %v1591 = vpack.c.b16 %v1584, %v1583
        %v1592 = vpack.c.b16 %v1586, %v1585
        %v1593 = vpack.c.b16 %v1588, %v1587
        %v1594 = vpack.c.b16 %v1590, %v1589
        %vm1599 = vcmask 523264
        %v1601 = vsel %vm1599, %v1567, 0
        %v1604 = vsel %vm1599, %v1568, 0
        %1606 = vmatprep.subr.bf16.mxu0 0
        %1607 = vmatpush1.bf16.msra.mxu0 0
        %1608 = vmatprep.subr.bf16.mxu0 0
        %1609 = vmatpush1.bf16.msra.mxu0 0
        %1610 = vmatprep.subr.bf16.mxu0 0
        %1611 = vmatpush1.bf16.msra.mxu0 0
        %1612 = vmatprep.subr.bf16.mxu0 0
        %1613 = vmatpush1.bf16.msra.mxu0 0
        %1614 = vmatprep.subr.bf16.mxu0 0
        %1615 = vmatpush1.bf16.msra.mxu0 %v1594
        %1616 = vmatprep.subr.bf16.mxu0 0
        %1617 = vmatpush1.bf16.msra.mxu0 %v1593
        %1618 = vmatprep.subr.bf16.mxu0 0
        %1619 = vmatpush1.bf16.msra.mxu0 %v1592
        %1620 = vmatprep.subr.bf16.mxu0 0
        %1621 = vmatpush1.bf16.msra.mxu0 %v1591
        %1622 = vmatprep.subr.bf16.mxu0 0
        %1623 = vmatpush2.bf16.msra.mxu0 0
        %1624 = vmatprep.subr.bf16.mxu0 0
        %1625 = vmatpush2.bf16.msra.mxu0 0
        %1626 = vmatprep.subr.bf16.mxu0 0
        %1627 = vmatpush2.bf16.msra.mxu0 0
        %1628 = vmatprep.subr.bf16.mxu0 0
        %1629 = vmatpush2.bf16.msra.mxu0 0
        %1630 = vmatprep.subr.bf16.mxu0 0
        %1631 = vmatpush2.bf16.msra.mxu0 0
        %1632 = vmatprep.subr.bf16.mxu0 0
        %1633 = vmatpush2.bf16.msra.mxu0 0
        %1634 = vmatprep.subr.bf16.mxu0 0
        %1635 = vmatpush2.bf16.msra.mxu0 0
        %1636 = vmatprep.subr.bf16.mxu0 0
        %1637 = vmatpush2.bf16.msra.mxu0 0
        %1638 = vmatprep.mubr.bf16.mxu0 0
        %1639 = vmatmul.mubr.bf16.gmra.mxu0 %v1601
        %v1640 = vpop.f32.mrf.mxu0
        %v1641 = vadd.f32 %v1573, %v1640
        %v1642 = vpop.f32.mrf.mxu0
        %v1643 = vpop.f32.mrf.mxu0
        %v1644 = vadd.f32 %v1573, %v1643
        %v1645 = vpop.f32.mrf.mxu0
        %1646 = vmatprep.mubr.bf16.mxu0 0
        %1647 = vmatmul.mubr.bf16.gmra.mxu0 %v1604
        %v1648 = vpop.f32.mrf.mxu0
        %v1649 = vadd.f32 %v1573, %v1648
        %v1650 = vpop.f32.mrf.mxu0
        %v1651 = vpop.f32.mrf.mxu0
        %v1652 = vpop.f32.mrf.mxu0
        %1653 = vdwg.mxu0
        %v1654 = vadd.f32 %v1406, %v1641
        %v1655 = vadd.f32 %v1407, %v1644
        %v1656 = vadd.f32 %v1408, %v1649
        %1657 = vst.msk [vmem:[#allocation2] sm:$0xff] %vm797, %v1654
        %1658 = vst.msk [vmem:[#allocation2 + $0x8] sm:$0xff] %vm797, %v1655
        %1659 = vst.msk [vmem:[#allocation2 + $0x10] sm:$0x3] %vm804, %v1656
        %p1660 = scmp.eq.s32.totalorder %s36, 1
        // Predicated region
        $region93: #{vit_forward.3} parent=87 // pred_check
          %p1661 = pneg %p1660
        $region94: #{vit_forward.3} parent=87 // pred_check_branch
          %1663 = sbr.rel (%p1661) target = $region96
        $region95: #{vit_forward.3} parent=87 // pred_region
          %v1664 = vld [vmem:[#allocation2] sm:$0xff]
          %v1665 = vld [vmem:[%s13] sm:$0x1]
          %v1666 = vld [vmem:[%s14] sm:$0x1]
          %v1667 = vsel %vm1321, %v1664, 0.0
          %1668 = vadd.xlane.f32.xlu0 %v1667
          %v1669 = vpop.xlane.xlu0 %1668
          %v1670 = vmul.f32 %v1669, %v808
          %v1671 = vsub.f32 %v1664, %v1670
          %v1672 = vmul.f32 %v1671, %v1671
          %v1673 = vsel %vm1321, %v1672, 0.0
          %1674 = vadd.xlane.f32.xlu0 %v1673
          %v1675 = vpop.xlane.xlu0 %1674
          %v1676 = vmul.f32 %v1675, %v808
          %v1677 = vadd.f32 %v1676, 1e-05
          %v1678 = vrsqrt.pop %v1677
          %v1679 = vmul.f32 %v1671, %v1678
          %v1680 = vmul.f32 %v1679, %v1665
          %v1681 = vadd.f32 %v1680, %v1666
          %v1682 = vpack.c.bf16 %v1681, %v1681
          %v1683 = vld [vmem:[%s15] sm:$0xf]
          %v1684 = vld [vmem:[%s15 + $0x4] sm:$0xf]
          %v1685 = vld [vmem:[%s15 + $0x8] sm:$0xf]
          %v1686 = vld [vmem:[%s15 + $0xc] sm:$0xf]
          %v1687 = vld [vmem:[%s16] sm:$0x1]
          %v1692 = vunpack.c.l.b16 %v1683
          %v1693 = vunpack.c.l.b16 %v1684
          %v1694 = vunpack.c.l.b16 %v1685
          %v1695 = vunpack.c.l.b16 %v1686
          %v1696 = vpack.c.b16 %v1693, %v1692
          %v1697 = vpack.c.b16 %v1695, %v1694
          %v1701 = vsel %vm797, %v1682, 0
          %1703 = vmatprep.subr.bf16.mxu0 0
          %1704 = vmatpush1.bf16.msra.mxu0 0
          %1705 = vmatprep.subr.bf16.mxu0 0
          %1706 = vmatpush1.bf16.msra.mxu0 0
          %1707 = vmatprep.subr.bf16.mxu0 0
          %1708 = vmatpush1.bf16.msra.mxu0 0
          %1709 = vmatprep.subr.bf16.mxu0 0
          %1710 = vmatpush1.bf16.msra.mxu0 0
          %1711 = vmatprep.subr.bf16.mxu0 0
          %1712 = vmatpush1.bf16.msra.mxu0 0
          %1713 = vmatprep.subr.bf16.mxu0 0
          %1714 = vmatpush1.bf16.msra.mxu0 0
          %1715 = vmatprep.subr.bf16.mxu0 0
          %1716 = vmatpush1.bf16.msra.mxu0 %v1697
          %1717 = vmatprep.subr.bf16.mxu0 0
          %1718 = vmatpush1.bf16.msra.mxu0 %v1696
          %1719 = vmatprep.subr.bf16.mxu0 0
          %1720 = vmatpush2.bf16.msra.mxu0 0
          %1721 = vmatprep.subr.bf16.mxu0 0
          %1722 = vmatpush2.bf16.msra.mxu0 0
          %1723 = vmatprep.subr.bf16.mxu0 0
          %1724 = vmatpush2.bf16.msra.mxu0 0
          %1725 = vmatprep.subr.bf16.mxu0 0
          %1726 = vmatpush2.bf16.msra.mxu0 0
          %1727 = vmatprep.subr.bf16.mxu0 0
          %1728 = vmatpush2.bf16.msra.mxu0 0
          %1729 = vmatprep.subr.bf16.mxu0 0
          %1730 = vmatpush2.bf16.msra.mxu0 0
          %1731 = vmatprep.subr.bf16.mxu0 0
          %1732 = vmatpush2.bf16.msra.mxu0 0
          %1733 = vmatprep.subr.bf16.mxu0 0
          %1734 = vmatpush2.bf16.msra.mxu0 0
          %1735 = vmatprep.mubr.bf16.mxu0 0
          %1736 = vmatmul.mubr.bf16.gmra.mxu0 %v1701
          %v1737 = vpop.f32.mrf.mxu0
          %v1738 = vadd.f32 %v1687, %v1737
          %v1739 = vpop.f32.mrf.mxu0
          %v1740 = vpop.f32.mrf.mxu0
          %v1741 = vpop.f32.mrf.mxu0
          %1742 = vdwg.mxu0
          %1743 = vst [vmem:[%s700] sm:$0x1] %v1738
        $region96: #{vit_forward.3} parent=87 // pred_fallthru
          _
        %s1744 = sand.u32 %s473, 1
        %s1745 = scalar_lea.sflag [#allocation6], %s1744
        %s1746 = sand.u32 %s473, 1
        %s1747 = scalar_lea.vmem [#allocation5], %s1746
        // Predicated region
        $region97: #{vit_forward.3} parent=87 // pred_check
          %p1748 = pneg %p483
        $region98: #{vit_forward.3} parent=87 // pred_check_branch
          %1750 = sbr.rel (%p1748) target = $region100
        $region99: #{vit_forward.3} parent=87 // pred_region
          %s1752 = ssub.s32 16, 16
          %1753 = vsyncadd %s1745, %s1752
          %s1754 = smul.addr %s35, 16
          %s1755 = scalar_lea.hbm %s17, %s1754
          %s1757 = sshll.u32 %s1747, 4
          %s1758 = int_to_ptr.vmem [resolvable:$true] %s1757
          %1760 = dma.vmem_to_hbm [thread:$0]  %s1758, 16, %s1755, %s1745
        $region100: #{vit_forward.3} parent=87 // pred_fallthru
          _
      $region88: #{vit_forward.3} parent=5 // pred_fallthru
        _
      %p1761 = scmp.le.s32.totalorder 2, %s26
      // Predicated region
      $region101: #{vit_forward.3} parent=5 // pred_check
        %p1762 = pneg %p1761
      $region102: #{vit_forward.3} parent=5 // pred_check_branch
        %1764 = sbr.rel (%p1762) target = $region104
      $region103: #{vit_forward.3} parent=5 // pred_region
        %s1765 = ssub.s32 %s26, 2
        // Predicated region
        $region105: #{vit_forward.3} parent=103 // pred_check
          %p1766 = pneg %p489
        $region106: #{vit_forward.3} parent=103 // pred_check_branch
          %1768 = sbr.rel (%p1766) target = $region108
        $region107: #{vit_forward.3} parent=103 // pred_region
          %s1769 = sand.u32 %s474, 1
          %s1770 = scalar_lea.sflag [#allocation6], %s1769
          %s1771 = sand.u32 %s474, 1
          %s1772 = scalar_lea.vmem [#allocation5], %s1771
          %1773 = dma.done %s1770, 16
        $region108: #{vit_forward.3} parent=103 // pred_fallthru
          _
      $region104: #{vit_forward.3} parent=5 // pred_fallthru
        _
    $region6: #{vit_forward.3} parent=1 // loop_footer
      %s30 = sadd.s32 1, %s26
    $region7: #{vit_forward.3} parent=1 // loop_footer_branch
      %25 = sbr.rel target = $region3
    $region8: #{vit_forward.3} parent=1 // loop_exit
      _
    %1774 = vsyncpa [#allocation6], 1
    %s1775 = scalar_lea.sflag [#allocation6], 1
    %1776 = vsyncpa %s1775, 1

</llo_original>
